<compile_context>
chip_gen: v5e
topology: v5e:2x2
jax: 0.10.0
libtpu: 0.0.40
codegen_flags: <defaults>
</compile_context>

<pallas_src>
import functools

import jax
import jax.numpy as jnp
from jax.experimental import pallas as pl
from jax.experimental.pallas import tpu as pltpu


# ----------------------------------------------------------------------------
# Static (Python-time) helpers.
# ----------------------------------------------------------------------------
def _round_up(n, m):
    return -(-n // m) * m


def _smallest_divisor_geq(n, m):
    for d in range(max(1, m), n + 1):
        if n % d == 0:
            return d
    return n


def _select_channel_tile(c, cap):
    """Channel tile: must be a multiple of 128 or the full dim (lane rule)."""
    if cap is None or c <= 128 or c % 128 != 0:
        return c
    cap = max(128, cap - cap % 128)
    best = 128
    for t in range(128, min(c, cap) + 1, 128):
        if c % t == 0:
            best = t
    return best


def _vmem_capacity_bytes():
    try:
        return int(pltpu.get_tpu_info().vmem_capacity_bytes)
    except Exception:
        return 128 * 1024 * 1024            # v5e/v6e; v7x reports 64 MiB


def _vmem_limit_bytes():
    """~75% of the chip's physical VMEM."""
    return (_vmem_capacity_bytes() // 4) * 3


def _auto_block_rows(wp_cols, wo_pad, tc, to_est, c, stride, itemsize):
    """Pick output rows per grid step from the chip's VMEM capacity
    (automatically smaller on v7x's 64 MiB than on v5e/v6e's 128 MiB)."""
    budget = int(_vmem_capacity_bytes() * 0.55)
    fixed = 2 * c * to_est * itemsize + (64 << 10)       # resident wp / wd
    per_row = (2 * stride * wp_cols * tc * itemsize      # x1 (double buffered)
               + 2 * wo_pad * to_est * itemsize          # out (double buffered)
               + wo_pad * to_est * 4                     # f32 accumulator
               + 3 * wo_pad * tc * 4)                    # shifted-slab temps
    rows = (budget - fixed) // max(per_row, 1)
    return int(max(8, min(256, rows)))


def _prefer_fold(to_tile):
    """Fold the depthwise taps into per-tap MXU matmuls?  Always worth it on
    v6e/v7x; on v5e's small MXU only while the per-tap matmul is narrow."""
    if to_tile <= 128:
        return True
    try:
        kind = jax.devices()[0].device_kind.lower()
    except Exception:
        kind = ""
    if ("v5 lite" in kind) or ("v5e" in kind) or ("v5litepod" in kind):
        return False
    return True


# ----------------------------------------------------------------------------
# Kernel.
# ----------------------------------------------------------------------------
def _sepconv_kernel(*refs, K, stride, dilation, TH, Wo, TC, nCb, halo_rows,
                    fold, mxu_dtype):
    """One grid step: K*K depthwise taps + 1x1 pointwise for one
    (row-block, O-tile, C-tile); accumulated over the C grid axis.

    refs (halo_rows > 0):  x1, x2, wd, wp, out, acc
    refs (halo_rows == 0): x1,     wd, wp, out, acc
      x1 : (1, rows, Wp, TC)  row block of the zero-padded input (native dtype)
      x2 : (1, R,   Wp, TC)   first rows of the *next* row block (halo)
      wd : (K*K, C)           depthwise weights   (grid-resident)
      wp : (C, TO)            pointwise weights   (resident per O block)
      out: (1, TH, Wo, TO)
      acc: (TH*Wo, TO) f32    accumulator, persistent across the C axis
    """
    if halo_rows > 0:
        x1_ref, x2_ref, wd_ref, wp_ref, o_ref, acc_ref = refs
    else:
        x1_ref, wd_ref, wp_ref, o_ref, acc_ref = refs

    cb = pl.program_id(3)

    @pl.when(cb == 0)
    def _init():
        acc_ref[...] = jnp.zeros_like(acc_ref)

    # Input rows for this tile; halo rows come from the second blocked spec.
    x = x1_ref[0]
    if halo_rows > 0:
        x = jnp.concatenate([x, x2_ref[0, :halo_rows]], axis=0)

    # Channel-tile views of the grid-resident weights.
    if nCb > 1:
        c0 = pl.multiple_of(cb * TC, TC)
        wd_c = wd_ref[:, pl.ds(c0, TC)]          # (K*K, TC)
        wp_c = wp_ref[pl.ds(c0, TC), :]          # (TC, TO)
    else:
        wd_c = wd_ref[...]
        wp_c = wp_ref[...]

    # Build the K width-shifted slabs ONCE (K materialized copies instead of
    # K*K sublane-unaligned slices inside the tap loop).
    w_span = (Wo - 1) * stride + 1
    h_span = (TH - 1) * stride + 1
    if fold:
        x = x.astype(mxu_dtype)
    # NOTE: stride == 1 in all tested configs; stride > 1 uses strided slices.
    # TODO(synk): for stride>1, pre-split W columns in the wrapper instead of
    # strided sublane slices here.
    slabs = [x[:, kw * dilation:kw * dilation + w_span:stride, :]
             for kw in range(K)]

    if fold:
        # Depthwise folded into the MXU:
        #   acc += sum_{kh,kw} patch_{kh,kw} @ (wd_{kh,kw}[:,None] * wp)
        # The folded (TC, TO) weight is tiny; the big per-element VPU
        # scale+accumulate disappears entirely.
        wp_f32 = wp_c.astype(jnp.float32)
        part = None
        for kh in range(K):
            h0 = kh * dilation
            for kw in range(K):
                patch = slabs[kw][h0:h0 + h_span:stride]        # (TH, Wo, TC)
                folded = (wd_c[kh * K + kw, :].astype(jnp.float32)[:, None]
                          * wp_f32).astype(mxu_dtype)           # (TC, TO)
                d = jnp.dot(patch.reshape(TH * Wo, TC), folded,
                            preferred_element_type=jnp.float32)
                part = d if part is None else part + d
        acc_ref[...] += part
    else:
        # VPU depthwise path (kept for v5e at large TO): f32 z-accumulate,
        # then a single pointwise MXU matmul over this channel tile.
        wd_f32 = wd_c.astype(jnp.float32)                       # hoisted cast
        z = jnp.zeros((TH, Wo, TC), jnp.float32)
        for kh in range(K):
            h0 = kh * dilation
            for kw in range(K):
                patch = slabs[kw][h0:h0 + h_span:stride]
                z = z + patch.astype(jnp.float32) * wd_f32[kh * K + kw, :]
        acc_ref[...] += jnp.dot(z.reshape(TH * Wo, TC).astype(mxu_dtype),
                                wp_c.astype(mxu_dtype),
                                preferred_element_type=jnp.float32)

    @pl.when(cb == pl.num_programs(3) - 1)
    def _finalize():
        TO = acc_ref.shape[-1]
        o_ref[0] = acc_ref[...].reshape(TH, Wo, TO).astype(o_ref.dtype)


# ----------------------------------------------------------------------------
# Wrapper.
# ----------------------------------------------------------------------------
def separable_conv2d(x_nchw, w_depthwise, w_pointwise, *, stride=1, padding=0,
                     dilation=1, block_rows=None, c_block=512, o_block=None,
                     fold_depthwise=None, use_bf16_mxu=False):
    """Forward pass of SeparableConv2d (depthwise conv -> 1x1 pointwise conv).

    x_nchw      : (N, C, H, W)   -- PyTorch layout
    w_depthwise : (C, 1, K, K)   -- nn.Conv2d(C, C, K, groups=C, bias=False)
    w_pointwise : (O, C, 1, 1)   -- nn.Conv2d(C, O, 1, bias=False)
    returns     : (N, O, Ho, Wo)
    """
    N, C, H, W = x_nchw.shape
    K = int(w_depthwise.shape[-1])
    O = int(w_pointwise.shape[0])
    assert w_depthwise.shape == (C, 1, K, K)
    assert w_pointwise.shape == (O, C, 1, 1)
    assert stride >= 1 and dilation >= 1 and padding >= 0

    HALO = dilation * (K - 1)
    Ho = (H + 2 * padding - HALO - 1) // stride + 1
    Wo = (W + 2 * padding - HALO - 1) // stride + 1
    assert Ho > 0 and Wo > 0, "empty output"

    # ---- lane / sublane alignment -------------------------------------------
    Wo_pad = _round_up(Wo, 8)               # sublane-dense reshapes, dense vst
    TC = _select_channel_tile(C, c_block)
    nCb = C // TC
    Wp_cols = (Wo_pad - 1) * stride + HALO + 1
    itemsize = jnp.dtype(x_nchw.dtype).itemsize

    # ---- output-row tiling (VMEM-budgeted, megacore-aware, ragged tail) -----
    to_est = O if (O <= 256 or O % 128 != 0) else 256
    if block_rows is None:
        block_rows = _auto_block_rows(Wp_cols, Wo_pad, TC, to_est, C, stride,
                                      itemsize)
    TH = max(1, min(block_rows, Ho))
    if N == 1 and Ho >= 2:                   # >=2 parallel row blocks (v7x TCs)
        TH = min(TH, _round_up(Ho, 2) // 2)
    halo_rows0 = max(0, HALO - stride + 1)
    if TH < Ho and TH * stride < halo_rows0:
        TH = min(Ho, -(-halo_rows0 // stride))
    Ho_pad = _round_up(Ho, TH)
    nHb = Ho_pad // TH
    TH_in = TH * stride

    if nHb > 1:
        halo_rows = halo_rows0
        x1_rows = TH_in
        if halo_rows > 0:
            R_blk = _smallest_divisor_geq(TH_in, halo_rows)
            ratio = TH_in // R_blk
        else:
            R_blk, ratio = 0, 0
        rows_target = nHb * TH_in + R_blk
    else:
        halo_rows, R_blk, ratio = 0, 0, 0
        x1_rows = (TH - 1) * stride + HALO + 1
        rows_target = x1_rows

    # ---- O tiling: keep TO = O (single O block) whenever the accumulator
    #      fits, so x is never re-fetched per O block. ------------------------
    if o_block is None:
        acc_bytes = TH * Wo_pad * O * 4
        if O % 128 == 0 and O > 128 and acc_bytes > (8 << 20):
            o_cap = max(128, (8 << 20) // (TH * Wo_pad * 4))
            TO = _select_channel_tile(O, o_cap)
        else:
            TO = O
    else:
        TO = _select_channel_tile(O, o_block)
    nOb = O // TO

    fold = _prefer_fold(TO) if fold_depthwise is None else bool(fold_depthwise)
    mxu_dtype = jnp.bfloat16 if use_bf16_mxu else jnp.dtype(w_pointwise.dtype)

    # ---- layout glue: NCHW -> NHWC, conv zero padding + alignment padding ---
    # TODO(synk): fold these transposes / the pad into neighbouring ops when
    # the surrounding graph is already NHWC (they are extra HBM round trips).
    Hp = H + 2 * padding
    Wp = W + 2 * padding
    extra_h = max(0, rows_target - Hp)
    extra_w = max(0, Wp_cols - Wp)

    x = jnp.transpose(x_nchw, (0, 2, 3, 1))                        # (N,H,W,C)
    if padding or extra_h or extra_w:
        x = jnp.pad(x, ((0, 0), (padding, padding + extra_h),
                        (padding, padding + extra_w), (0, 0)))
    Wp2 = x.shape[2]

    wd = jnp.transpose(w_depthwise[:, 0].reshape(C, K * K), (1, 0))  # (K*K, C)
    wp = jnp.transpose(w_pointwise[:, :, 0, 0], (1, 0))             # (C, O)

    # ---- specs ---------------------------------------------------------------
    in_specs = [pl.BlockSpec((1, x1_rows, Wp2, TC),
                             lambda n, hb, ob, cb: (n, hb, 0, cb))]
    inputs = [x]
    if R_blk > 0:
        # Halo = first rows of the *next* row block, via a second small spec.
        in_specs.append(pl.BlockSpec(
            (1, R_blk, Wp2, TC),
            lambda n, hb, ob, cb: (n, (hb + 1) * ratio, 0, cb)))
        inputs.append(x)
    # wd / wp are grid-resident: their block index never changes across
    # n / hb / cb, so the pipeline only (re-)DMAs wp when ob changes.
    in_specs += [
        pl.BlockSpec((K * K, C), lambda n, hb, ob, cb: (0, 0)),
        pl.BlockSpec((C, TO), lambda n, hb, ob, cb: (0, ob)),
    ]
    inputs += [wd, wp]

    out_specs = pl.BlockSpec((1, TH, Wo_pad, TO),
                             lambda n, hb, ob, cb: (n, hb, 0, ob))

    kernel = functools.partial(
        _sepconv_kernel, K=K, stride=stride, dilation=dilation, TH=TH,
        Wo=Wo_pad, TC=TC, nCb=nCb, halo_rows=halo_rows, fold=fold,
        mxu_dtype=mxu_dtype)

    out_nhwc = pl.pallas_call(
        kernel,
        out_shape=jax.ShapeDtypeStruct((N, Ho_pad, Wo_pad, O), x_nchw.dtype),
        grid_spec=pltpu.PrefetchScalarGridSpec(
            num_scalar_prefetch=0,
            grid=(N, nHb, nOb, nCb),                 # C contraction innermost
            in_specs=in_specs,
            out_specs=out_specs,
            scratch_shapes=[pltpu.VMEM((TH * Wo_pad, TO), jnp.float32)]),
        compiler_params=pltpu.CompilerParams(
            dimension_semantics=("parallel", "parallel", "parallel",
                                 "arbitrary"),
            vmem_limit_bytes=_vmem_limit_bytes()),
    )(*inputs)

    if Ho_pad != Ho or Wo_pad != Wo:
        out_nhwc = out_nhwc[:, :Ho, :Wo, :]
    return jnp.transpose(out_nhwc, (0, 3, 1, 2))                   # (N,O,Ho,Wo)


# ----------------------------------------------------------------------------
# Reference + self-test.
# ----------------------------------------------------------------------------
def _reference(x_nchw, w_depthwise, w_pointwise, *, stride, padding, dilation):
    """Pure-JAX reference mirroring the PyTorch forward()."""
    C = x_nchw.shape[1]
    dn = ("NCHW", "OIHW", "NCHW")
    z = jax.lax.conv_general_dilated(
        x_nchw, w_depthwise, window_strides=(stride, stride),
        padding=[(padding, padding), (padding, padding)],
        rhs_dilation=(dilation, dilation), dimension_numbers=dn,
        feature_group_count=C)
    return jax.lax.conv_general_dilated(
        z, w_pointwise, window_strides=(1, 1), padding=[(0, 0), (0, 0)],
        dimension_numbers=dn)


def _check(key, *, N, C, H, W, O, K, stride=1, padding=0, dilation=1,
           block_rows=None, c_block=512, o_block=None, fold_depthwise=None):
    kx, kd, kp = jax.random.split(key, 3)
    x = jax.random.normal(kx, (N, C, H, W), jnp.float32)
    w_dw = jax.random.normal(kd, (C, 1, K, K), jnp.float32) * 0.1
    w_pw = jax.random.normal(kp, (O, C, 1, 1), jnp.float32) * 0.1

    out = separable_conv2d(x, w_dw, w_pw, stride=stride, padding=padding,
                           dilation=dilation, block_rows=block_rows,
                           c_block=c_block, o_block=o_block,
                           fold_depthwise=fold_depthwise)
    out = jax.block_until_ready(out)

    ref = _reference(x, w_dw, w_pw, stride=stride, padding=padding,
                     dilation=dilation)
    assert out.shape == ref.shape, (out.shape, ref.shape)
    err = float(jnp.max(jnp.abs(out - ref)))
    assert jnp.allclose(out, ref, atol=2e-4, rtol=2e-4), f"max abs err {err}"


if __name__ == "__main__":
    root = jax.random.PRNGKey(0)
    keys = jax.random.split(root, 6)

    # SeparableConv2d(4, 8, kernel_size=3, padding=1): multi row-block + halo.
    _check(keys[0], N=2, C=4, H=16, W=16, O=8, K=3, padding=1, block_rows=8)
    # Module default kernel_size=1 (pure pointwise path, no halo).
    _check(keys[1], N=2, C=4, H=16, W=16, O=8, K=1, padding=0, block_rows=8)
    # Dilated taps + auto (VMEM-derived) row tiling.
    _check(keys[2], N=1, C=4, H=16, W=16, O=8, K=3, padding=2, dilation=2)
    # Ragged H (row tile does not divide Ho) + W padded up to a sublane mult.
    _check(keys[3], N=2, C=4, H=18, W=13, O=8, K=3, padding=1, block_rows=8)
    # Production-like channels: C-reduction grid axis, O tiling, MXU fold path.
    _check(keys[4], N=1, C=256, H=8, W=8, O=256, K=3, padding=1,
           block_rows=8, c_block=128, o_block=128, fold_depthwise=True)
    # Same shapes on the gated VPU depthwise path (v5e large-TO fallback).
    _check(keys[5], N=1, C=256, H=8, W=8, O=256, K=3, padding=1,
           block_rows=8, c_block=128, o_block=128, fold_depthwise=False)

    print("KERNEL_OK")
</pallas_src>

<mosaic_0001>
module attributes {stable_mosaic.version = 11 : i64} {
  func.func @_sepconv_kernel(%arg0: i32, %arg1: i32, %arg2: i32, %arg3: i32, %arg4: memref<1x8x18x4xf32, #tpu.memory_space<vmem>>, %arg5: memref<1x2x18x4xf32, #tpu.memory_space<vmem>>, %arg6: memref<9x4xf32, #tpu.memory_space<vmem>>, %arg7: memref<4x8xf32, #tpu.memory_space<vmem>>, %arg8: memref<1x8x16x8xf32, #tpu.memory_space<vmem>>, %arg9: memref<128x8xf32, #tpu.memory_space<vmem>>) attributes {dimension_semantics = [#tpu.dimension_semantics<parallel>, #tpu.dimension_semantics<parallel>, #tpu.dimension_semantics<parallel>, #tpu.dimension_semantics<arbitrary>], iteration_bounds = array<i64: 2, 2, 1, 1>, scalar_prefetch = 0 : i64, scratch_operands = 1 : i64, tpu.core_type = #tpu.core_type<tc>, window_params = [{transform_indices = @transform_0, window_bounds = array<i64: 1, 8, 18, 4>}, {transform_indices = @transform_1, window_bounds = array<i64: 1, 2, 18, 4>}, {pipeline_mode = #tpu.pipeline_mode<synchronous>, transform_indices = @transform_2, window_bounds = array<i64: 9, 4>}, {transform_indices = @transform_3, window_bounds = array<i64: 4, 8>}, {transform_indices = @transform_4, window_bounds = array<i64: 1, 8, 16, 8>}]} {
    %c0_i32 = arith.constant 0 : i32
    %0 = arith.cmpi eq, %arg3, %c0_i32 : i32
    %1 = arith.extui %0 : i1 to i32
    %c0_i32_0 = arith.constant 0 : i32
    %2 = arith.cmpi ne, %1, %c0_i32_0 : i32
    scf.if %2 {
      %cst_26 = arith.constant 0.000000e+00 : f32
      %99 = vector.broadcast %cst_26 : f32 to vector<128x8xf32>
      %c0_27 = arith.constant 0 : index
      %c0_28 = arith.constant 0 : index
      %100 = vector.load %arg9[%c0_27, %c0_28] : memref<128x8xf32, #tpu.memory_space<vmem>>, vector<128x8xf32>
      tpu.vector_store %arg9[%c0_27, %c0_28], %99 {strides = array<i32>} : memref<128x8xf32, #tpu.memory_space<vmem>>, vector<128x8xf32>,
    } else {
    }
    %c0 = arith.constant 0 : index
    %c0_1 = arith.constant 0 : index
    %c0_2 = arith.constant 0 : index
    %c0_3 = arith.constant 0 : index
    %3 = vector.load %arg4[%c0, %c0_1, %c0_2, %c0_3] : memref<1x8x18x4xf32, #tpu.memory_space<vmem>>, vector<1x8x18x4xf32>
    %4 = vector.shape_cast %3 : vector<1x8x18x4xf32> to vector<8x18x4xf32>
    %c0_4 = arith.constant 0 : index
    %c0_5 = arith.constant 0 : index
    %c0_6 = arith.constant 0 : index
    %c0_7 = arith.constant 0 : index
    %5 = vector.load %arg5[%c0_4, %c0_5, %c0_6, %c0_7] : memref<1x2x18x4xf32, #tpu.memory_space<vmem>>, vector<1x2x18x4xf32>
    %6 = vector.shape_cast %5 : vector<1x2x18x4xf32> to vector<2x18x4xf32>
    %7 = tpu.concatenate %4, %6 in 0 : vector<8x18x4xf32>, vector<2x18x4xf32> -> vector<10x18x4xf32>
    %c0_8 = arith.constant 0 : index
    %c0_9 = arith.constant 0 : index
    %8 = vector.load %arg6[%c0_8, %c0_9] : memref<9x4xf32, #tpu.memory_space<vmem>>, vector<9x4xf32>
    %c0_10 = arith.constant 0 : index
    %c0_11 = arith.constant 0 : index
    %9 = vector.load %arg7[%c0_10, %c0_11] : memref<4x8xf32, #tpu.memory_space<vmem>>, vector<4x8xf32>
    %10 = vector.extract_strided_slice %7 {offsets = [0, 0, 0], sizes = [10, 16, 4], strides = [1, 1, 1]} : vector<10x18x4xf32> to vector<10x16x4xf32>
    %11 = vector.extract_strided_slice %7 {offsets = [0, 1, 0], sizes = [10, 16, 4], strides = [1, 1, 1]} : vector<10x18x4xf32> to vector<10x16x4xf32>
    %12 = vector.extract_strided_slice %7 {offsets = [0, 2, 0], sizes = [10, 16, 4], strides = [1, 1, 1]} : vector<10x18x4xf32> to vector<10x16x4xf32>
    %13 = vector.extract_strided_slice %10 {offsets = [0, 0, 0], sizes = [8, 16, 4], strides = [1, 1, 1]} : vector<10x16x4xf32> to vector<8x16x4xf32>
    %14 = vector.extract_strided_slice %8 {offsets = [0, 0], sizes = [1, 4], strides = [1, 1]} : vector<9x4xf32> to vector<1x4xf32>
    %15 = vector.shape_cast %14 : vector<1x4xf32> to vector<4xf32>
    %16 = vector.shape_cast %15 : vector<4xf32> to vector<4x1xf32>
    %17 = vector.broadcast %16 : vector<4x1xf32> to vector<4x8xf32>
    %18 = arith.mulf %17, %9 : vector<4x8xf32>
    %19 = vector.shape_cast %13 : vector<8x16x4xf32> to vector<128x4xf32>
    %cst = arith.constant dense<0.000000e+00> : vector<128x8xf32>
    %20 = tpu.matmul %19, %18, %cst {dimension_numbers = #tpu.dot_dimension_numbers<[1], [0], [0], [1], [0, 0, 1, 1], [], []>} : vector<128x4xf32>, vector<4x8xf32>, vector<128x8xf32> -> vector<128x8xf32>
    %21 = vector.extract_strided_slice %11 {offsets = [0, 0, 0], sizes = [8, 16, 4], strides = [1, 1, 1]} : vector<10x16x4xf32> to vector<8x16x4xf32>
    %22 = vector.extract_strided_slice %8 {offsets = [1, 0], sizes = [1, 4], strides = [1, 1]} : vector<9x4xf32> to vector<1x4xf32>
    %23 = vector.shape_cast %22 : vector<1x4xf32> to vector<4xf32>
    %24 = vector.shape_cast %23 : vector<4xf32> to vector<4x1xf32>
    %25 = vector.broadcast %24 : vector<4x1xf32> to vector<4x8xf32>
    %26 = arith.mulf %25, %9 : vector<4x8xf32>
    %27 = vector.shape_cast %21 : vector<8x16x4xf32> to vector<128x4xf32>
    %cst_12 = arith.constant dense<0.000000e+00> : vector<128x8xf32>
    %28 = tpu.matmul %27, %26, %cst_12 {dimension_numbers = #tpu.dot_dimension_numbers<[1], [0], [0], [1], [0, 0, 1, 1], [], []>} : vector<128x4xf32>, vector<4x8xf32>, vector<128x8xf32> -> vector<128x8xf32>
    %29 = arith.addf %20, %28 : vector<128x8xf32>
    %30 = vector.extract_strided_slice %12 {offsets = [0, 0, 0], sizes = [8, 16, 4], strides = [1, 1, 1]} : vector<10x16x4xf32> to vector<8x16x4xf32>
    %31 = vector.extract_strided_slice %8 {offsets = [2, 0], sizes = [1, 4], strides = [1, 1]} : vector<9x4xf32> to vector<1x4xf32>
    %32 = vector.shape_cast %31 : vector<1x4xf32> to vector<4xf32>
    %33 = vector.shape_cast %32 : vector<4xf32> to vector<4x1xf32>
    %34 = vector.broadcast %33 : vector<4x1xf32> to vector<4x8xf32>
    %35 = arith.mulf %34, %9 : vector<4x8xf32>
    %36 = vector.shape_cast %30 : vector<8x16x4xf32> to vector<128x4xf32>
    %cst_13 = arith.constant dense<0.000000e+00> : vector<128x8xf32>
    %37 = tpu.matmul %36, %35, %cst_13 {dimension_numbers = #tpu.dot_dimension_numbers<[1], [0], [0], [1], [0, 0, 1, 1], [], []>} : vector<128x4xf32>, vector<4x8xf32>, vector<128x8xf32> -> vector<128x8xf32>
    %38 = arith.addf %29, %37 : vector<128x8xf32>
    %39 = vector.extract_strided_slice %10 {offsets = [1, 0, 0], sizes = [8, 16, 4], strides = [1, 1, 1]} : vector<10x16x4xf32> to vector<8x16x4xf32>
    %40 = vector.extract_strided_slice %8 {offsets = [3, 0], sizes = [1, 4], strides = [1, 1]} : vector<9x4xf32> to vector<1x4xf32>
    %41 = vector.shape_cast %40 : vector<1x4xf32> to vector<4xf32>
    %42 = vector.shape_cast %41 : vector<4xf32> to vector<4x1xf32>
    %43 = vector.broadcast %42 : vector<4x1xf32> to vector<4x8xf32>
    %44 = arith.mulf %43, %9 : vector<4x8xf32>
    %45 = vector.shape_cast %39 : vector<8x16x4xf32> to vector<128x4xf32>
    %cst_14 = arith.constant dense<0.000000e+00> : vector<128x8xf32>
    %46 = tpu.matmul %45, %44, %cst_14 {dimension_numbers = #tpu.dot_dimension_numbers<[1], [0], [0], [1], [0, 0, 1, 1], [], []>} : vector<128x4xf32>, vector<4x8xf32>, vector<128x8xf32> -> vector<128x8xf32>
    %47 = arith.addf %38, %46 : vector<128x8xf32>
    %48 = vector.extract_strided_slice %11 {offsets = [1, 0, 0], sizes = [8, 16, 4], strides = [1, 1, 1]} : vector<10x16x4xf32> to vector<8x16x4xf32>
    %49 = vector.extract_strided_slice %8 {offsets = [4, 0], sizes = [1, 4], strides = [1, 1]} : vector<9x4xf32> to vector<1x4xf32>
    %50 = vector.shape_cast %49 : vector<1x4xf32> to vector<4xf32>
    %51 = vector.shape_cast %50 : vector<4xf32> to vector<4x1xf32>
    %52 = vector.broadcast %51 : vector<4x1xf32> to vector<4x8xf32>
    %53 = arith.mulf %52, %9 : vector<4x8xf32>
    %54 = vector.shape_cast %48 : vector<8x16x4xf32> to vector<128x4xf32>
    %cst_15 = arith.constant dense<0.000000e+00> : vector<128x8xf32>
    %55 = tpu.matmul %54, %53, %cst_15 {dimension_numbers = #tpu.dot_dimension_numbers<[1], [0], [0], [1], [0, 0, 1, 1], [], []>} : vector<128x4xf32>, vector<4x8xf32>, vector<128x8xf32> -> vector<128x8xf32>
    %56 = arith.addf %47, %55 : vector<128x8xf32>
    %57 = vector.extract_strided_slice %12 {offsets = [1, 0, 0], sizes = [8, 16, 4], strides = [1, 1, 1]} : vector<10x16x4xf32> to vector<8x16x4xf32>
    %58 = vector.extract_strided_slice %8 {offsets = [5, 0], sizes = [1, 4], strides = [1, 1]} : vector<9x4xf32> to vector<1x4xf32>
    %59 = vector.shape_cast %58 : vector<1x4xf32> to vector<4xf32>
    %60 = vector.shape_cast %59 : vector<4xf32> to vector<4x1xf32>
    %61 = vector.broadcast %60 : vector<4x1xf32> to vector<4x8xf32>
    %62 = arith.mulf %61, %9 : vector<4x8xf32>
    %63 = vector.shape_cast %57 : vector<8x16x4xf32> to vector<128x4xf32>
    %cst_16 = arith.constant dense<0.000000e+00> : vector<128x8xf32>
    %64 = tpu.matmul %63, %62, %cst_16 {dimension_numbers = #tpu.dot_dimension_numbers<[1], [0], [0], [1], [0, 0, 1, 1], [], []>} : vector<128x4xf32>, vector<4x8xf32>, vector<128x8xf32> -> vector<128x8xf32>
    %65 = arith.addf %56, %64 : vector<128x8xf32>
    %66 = vector.extract_strided_slice %10 {offsets = [2, 0, 0], sizes = [8, 16, 4], strides = [1, 1, 1]} : vector<10x16x4xf32> to vector<8x16x4xf32>
    %67 = vector.extract_strided_slice %8 {offsets = [6, 0], sizes = [1, 4], strides = [1, 1]} : vector<9x4xf32> to vector<1x4xf32>
    %68 = vector.shape_cast %67 : vector<1x4xf32> to vector<4xf32>
    %69 = vector.shape_cast %68 : vector<4xf32> to vector<4x1xf32>
    %70 = vector.broadcast %69 : vector<4x1xf32> to vector<4x8xf32>
    %71 = arith.mulf %70, %9 : vector<4x8xf32>
    %72 = vector.shape_cast %66 : vector<8x16x4xf32> to vector<128x4xf32>
    %cst_17 = arith.constant dense<0.000000e+00> : vector<128x8xf32>
    %73 = tpu.matmul %72, %71, %cst_17 {dimension_numbers = #tpu.dot_dimension_numbers<[1], [0], [0], [1], [0, 0, 1, 1], [], []>} : vector<128x4xf32>, vector<4x8xf32>, vector<128x8xf32> -> vector<128x8xf32>
    %74 = arith.addf %65, %73 : vector<128x8xf32>
    %75 = vector.extract_strided_slice %11 {offsets = [2, 0, 0], sizes = [8, 16, 4], strides = [1, 1, 1]} : vector<10x16x4xf32> to vector<8x16x4xf32>
    %76 = vector.extract_strided_slice %8 {offsets = [7, 0], sizes = [1, 4], strides = [1, 1]} : vector<9x4xf32> to vector<1x4xf32>
    %77 = vector.shape_cast %76 : vector<1x4xf32> to vector<4xf32>
    %78 = vector.shape_cast %77 : vector<4xf32> to vector<4x1xf32>
    %79 = vector.broadcast %78 : vector<4x1xf32> to vector<4x8xf32>
    %80 = arith.mulf %79, %9 : vector<4x8xf32>
    %81 = vector.shape_cast %75 : vector<8x16x4xf32> to vector<128x4xf32>
    %cst_18 = arith.constant dense<0.000000e+00> : vector<128x8xf32>
    %82 = tpu.matmul %81, %80, %cst_18 {dimension_numbers = #tpu.dot_dimension_numbers<[1], [0], [0], [1], [0, 0, 1, 1], [], []>} : vector<128x4xf32>, vector<4x8xf32>, vector<128x8xf32> -> vector<128x8xf32>
    %83 = arith.addf %74, %82 : vector<128x8xf32>
    %84 = vector.extract_strided_slice %12 {offsets = [2, 0, 0], sizes = [8, 16, 4], strides = [1, 1, 1]} : vector<10x16x4xf32> to vector<8x16x4xf32>
    %85 = vector.extract_strided_slice %8 {offsets = [8, 0], sizes = [1, 4], strides = [1, 1]} : vector<9x4xf32> to vector<1x4xf32>
    %86 = vector.shape_cast %85 : vector<1x4xf32> to vector<4xf32>
    %87 = vector.shape_cast %86 : vector<4xf32> to vector<4x1xf32>
    %88 = vector.broadcast %87 : vector<4x1xf32> to vector<4x8xf32>
    %89 = arith.mulf %88, %9 : vector<4x8xf32>
    %90 = vector.shape_cast %84 : vector<8x16x4xf32> to vector<128x4xf32>
    %cst_19 = arith.constant dense<0.000000e+00> : vector<128x8xf32>
    %91 = tpu.matmul %90, %89, %cst_19 {dimension_numbers = #tpu.dot_dimension_numbers<[1], [0], [0], [1], [0, 0, 1, 1], [], []>} : vector<128x4xf32>, vector<4x8xf32>, vector<128x8xf32> -> vector<128x8xf32>
    %92 = arith.addf %83, %91 : vector<128x8xf32>
    %c0_20 = arith.constant 0 : index
    %c0_21 = arith.constant 0 : index
    %93 = vector.load %arg9[%c0_20, %c0_21] : memref<128x8xf32, #tpu.memory_space<vmem>>, vector<128x8xf32>
    %94 = arith.addf %93, %92 : vector<128x8xf32>
    %c0_22 = arith.constant 0 : index
    %c0_23 = arith.constant 0 : index
    %95 = vector.load %arg9[%c0_22, %c0_23] : memref<128x8xf32, #tpu.memory_space<vmem>>, vector<128x8xf32>
    tpu.vector_store %arg9[%c0_22, %c0_23], %94 {strides = array<i32>} : memref<128x8xf32, #tpu.memory_space<vmem>>, vector<128x8xf32>,
    %c0_i32_24 = arith.constant 0 : i32
    %96 = arith.cmpi eq, %arg3, %c0_i32_24 : i32
    %97 = arith.extui %96 : i1 to i32
    %c0_i32_25 = arith.constant 0 : i32
    %98 = arith.cmpi ne, %97, %c0_i32_25 : i32
    scf.if %98 {
      %c0_26 = arith.constant 0 : index
      %c0_27 = arith.constant 0 : index
      %99 = vector.load %arg9[%c0_26, %c0_27] : memref<128x8xf32, #tpu.memory_space<vmem>>, vector<128x8xf32>
      %100 = vector.shape_cast %99 : vector<128x8xf32> to vector<8x16x8xf32>
      %c0_28 = arith.constant 0 : index
      %c0_29 = arith.constant 0 : index
      %c0_30 = arith.constant 0 : index
      %c0_31 = arith.constant 0 : index
      %101 = vector.load %arg8[%c0_28, %c0_29, %c0_30, %c0_31] : memref<1x8x16x8xf32, #tpu.memory_space<vmem>>, vector<1x8x16x8xf32>
      %102 = vector.shape_cast %101 : vector<1x8x16x8xf32> to vector<8x16x8xf32>
      %103 = vector.shape_cast %100 : vector<8x16x8xf32> to vector<1x8x16x8xf32>
      tpu.vector_store %arg8[%c0_28, %c0_29, %c0_30, %c0_31], %103 {strides = array<i32>} : memref<1x8x16x8xf32, #tpu.memory_space<vmem>>, vector<1x8x16x8xf32>,
    } else {
    }
    return
  }
  func.func @transform_0(%arg0: i32, %arg1: i32, %arg2: i32, %arg3: i32) -> (i32, i32, i32, i32) {
    %c0_i32 = arith.constant 0 : i32
    %c0_i32_0 = arith.constant 0 : i32
    return %arg0, %arg1, %c0_i32, %arg3 : i32, i32, i32, i32
  }
  func.func @transform_1(%arg0: i32, %arg1: i32, %arg2: i32, %arg3: i32) -> (i32, i32, i32, i32) {
    %c1_i32 = arith.constant 1 : i32
    %0 = arith.addi %arg1, %c1_i32 : i32
    %c4_i32 = arith.constant 4 : i32
    %1 = arith.muli %0, %c4_i32 : i32
    %c0_i32 = arith.constant 0 : i32
    %c0_i32_0 = arith.constant 0 : i32
    return %arg0, %1, %c0_i32, %arg3 : i32, i32, i32, i32
  }
  func.func @transform_2(%arg0: i32, %arg1: i32, %arg2: i32, %arg3: i32) -> (i32, i32) {
    %c0_i32 = arith.constant 0 : i32
    %c0_i32_0 = arith.constant 0 : i32
    %c0_i32_1 = arith.constant 0 : i32
    return %c0_i32, %c0_i32_0 : i32, i32
  }
  func.func @transform_3(%arg0: i32, %arg1: i32, %arg2: i32, %arg3: i32) -> (i32, i32) {
    %c0_i32 = arith.constant 0 : i32
    %c0_i32_0 = arith.constant 0 : i32
    return %c0_i32, %arg2 : i32, i32
  }
  func.func @transform_4(%arg0: i32, %arg1: i32, %arg2: i32, %arg3: i32) -> (i32, i32, i32, i32) {
    %c0_i32 = arith.constant 0 : i32
    %c0_i32_0 = arith.constant 0 : i32
    return %arg0, %arg1, %c0_i32, %arg2 : i32, i32, i32, i32
  }
}

</mosaic_0001>

<llo_original>
// kernel: tpu_custom_call.1
$region0: #{tpu_custom_call.1}
  #allocation0 [shape = 'u32[]', space=smem, size = 0x4, offset = 0x4, fixed_abs, tag = 'smem constant byte address 0x4 - core index']
  #allocation1 [shape = 'u32[72,128]{1,0:T(1,128)}', space=vmem, size = 0x9000, scoped, tag = 'internal scratch']
  #allocation2 [shape = 'f32[128,8]{1,0:T(8,128)}', space=vmem, size = 0x10000, scoped, tag = 'scratch operand']
  %s0 = inlined_call_operand.vmem [shape: f32[2,18,18,4], index: 0, kind: input, shape index: {}]
  %s1 = inlined_call_operand.vmem [shape: f32[2,18,18,4], index: 1, kind: input, shape index: {}]
  %s2 = inlined_call_operand.vmem [shape: f32[9,4], index: 2, kind: input, shape index: {}]
  %s3 = inlined_call_operand.vmem [shape: f32[4,8], index: 3, kind: input, shape index: {}]
  %s4 = inlined_call_operand.vmem [shape: f32[2,16,16,8], index: 4, kind: output, shape index: {}]
  %s5 = sld [smem:[#allocation0]]
  $region57: #{tpu_custom_call.1} parent=0
    _
  %s7 = ssub.s32 1, %s5
  %s8 = scalar_select 0, %s7, %s5
  loop: start=0, step=1, limit=6
  $region2: #{tpu_custom_call.1} parent=0 // loop_pre_header
    _
  $region3: #{tpu_custom_call.1} parent=0 // loop_header
    %s10 = sphi 0, %s14
    %p11 = scmp.ge.s32.totalorder %s10, 6
    %s17 = sphi 0, %s43
    %s18 = sphi 0, %s39
    %s19 = sphi 0, %s35
    %s20 = sphi 0, %s31
    %s21 = sphi 0, %s17
    %s22 = sphi 0, %s18
    %s23 = sphi 0, %s19
    %s24 = sphi 0, %s20
    %s25 = sphi 0, %s21
    %s26 = sphi 0, %s22
    %s27 = sphi 0, %s23
    %s28 = sphi 0, %s24
    %s50 = sphi 0, %s52
    %s53 = sphi 0, %s50
    %s54 = sphi 0, %s53
    %s70 = sphi 0, %s54
    %s84 = sphi 0, %s86
    %s87 = sphi 0, %s84
    %s88 = sphi 0, %s87
    %s104 = sphi 0, %s88
    %s108 = sphi 0, %s108
    %s110 = sphi 0, %s108
    %s111 = sphi 0, %s110
    %s125 = sphi 0, %s111
    %s131 = sphi 0, %s133
    %s134 = sphi 0, %s131
    %s135 = sphi 0, %s134
    %s151 = sphi 0, %s135
    %s161 = sphi 0, %s163
    %s164 = sphi 0, %s161
    %s165 = sphi 0, %s164
    %s181 = sphi 0, %s165
  $region4: #{tpu_custom_call.1} parent=0 // loop_header_branch
    %13 = sbr.rel (%p11) target = $region8
  $region5: #{tpu_custom_call.1} parent=0 // loop_body
    %s15 = ssub.s32 %s10, 1
    %s16 = ssub.s32 %s10, 2
    %s29 = sadd.s32 1, %s20
    %p30 = scmp.ge.s32.totalorder %s29, 1
    %s31 = scalar_select %p30, 0, %s29
    %s32 = sadd.s32 1, %s19
    %s33 = scalar_select %p30, %s32, %s19
    %p34 = scmp.ge.s32.totalorder %s33, 1
    %s35 = scalar_select %p34, 0, %s33
    %s36 = sadd.s32 1, %s18
    %s37 = scalar_select %p34, %s36, %s18
    %p38 = scmp.ge.s32.totalorder %s37, 2
    %s39 = scalar_select %p38, 0, %s37
    %s40 = sadd.s32 1, %s17
    %s41 = scalar_select %p38, %s40, %s17
    %p42 = scmp.ge.s32.totalorder %s41, 2
    %s43 = scalar_select %p42, 0, %s41
    %s44 = ssub.s32 %s17, %s43
    %s45 = ssub.s32 %s18, %s39
    %s46 = sor.u32 %s44, %s45
    %s47 = ssub.s32 %s20, %s31
    %s48 = sor.u32 %s46, %s47
    %p49 = scmp.eq.s32.totalorder %s48, 0
    %s51 = sadd.s32 %s50, 1
    %s52 = scalar_select %p49, %s50, %s51
    %p55 = pneg %p49
    %p56 = scmp.eq.s32.totalorder %s10, 3
    %p57 = por %p55, %p56
    %p58 = scmp.ne.s32.totalorder %s50, %s53
    %p59 = scmp.eq.s32.totalorder %s10, 0
    %p60 = por %p58, %p59
    %p61 = scmp.ne.s32.totalorder %s50, %s53
    %p62 = scmp.eq.s32.totalorder %s15, 3
    %p63 = por %p61, %p62
    %p64 = scmp.ne.s32.totalorder %s53, %s54
    %p65 = scmp.eq.s32.totalorder %s15, 0
    %p66 = por %p64, %p65
    %p67 = scmp.ne.s32.totalorder %s53, %s54
    %p68 = scmp.eq.s32.totalorder %s16, 3
    %p69 = por %p67, %p68
    %p71 = scmp.ne.s32.totalorder %s54, %s70
    %p72 = scmp.eq.s32.totalorder %s16, 0
    %p73 = por %p71, %p72
    %s74 = sadd.s32 %s18, 1
    %s75 = smul.u32 %s74, 4
    %s76 = sadd.s32 %s39, 1
    %s77 = smul.u32 %s76, 4
    %s78 = ssub.s32 %s17, %s43
    %s79 = ssub.s32 %s75, %s77
    %s80 = sor.u32 %s78, %s79
    %s81 = ssub.s32 %s20, %s31
    %s82 = sor.u32 %s80, %s81
    %p83 = scmp.eq.s32.totalorder %s82, 0
    %s85 = sadd.s32 %s84, 1
    %s86 = scalar_select %p83, %s84, %s85
    %p89 = pneg %p83
    %p90 = scmp.eq.s32.totalorder %s10, 3
    %p91 = por %p89, %p90
    %p92 = scmp.ne.s32.totalorder %s84, %s87
    %p93 = scmp.eq.s32.totalorder %s10, 0
    %p94 = por %p92, %p93
    %p95 = scmp.ne.s32.totalorder %s84, %s87
    %p96 = scmp.eq.s32.totalorder %s15, 3
    %p97 = por %p95, %p96
    %p98 = scmp.ne.s32.totalorder %s87, %s88
    %p99 = scmp.eq.s32.totalorder %s15, 0
    %p100 = por %p98, %p99
    %p101 = scmp.ne.s32.totalorder %s87, %s88
    %p102 = scmp.eq.s32.totalorder %s16, 3
    %p103 = por %p101, %p102
    %p105 = scmp.ne.s32.totalorder %s88, %s104
    %p106 = scmp.eq.s32.totalorder %s16, 0
    %p107 = por %p105, %p106
    %s109 = sadd.s32 %s108, 1
    %p112 = scmp.eq.s32.totalorder %s10, 3
    %p113 = scmp.ne.s32.totalorder %s108, %s110
    %p114 = scmp.eq.s32.totalorder %s10, 0
    %p115 = por %p113, %p114
    %p116 = scmp.ne.s32.totalorder %s108, %s110
    %p117 = scmp.eq.s32.totalorder %s15, 3
    %p118 = por %p116, %p117
    %p119 = scmp.ne.s32.totalorder %s110, %s111
    %p120 = scmp.eq.s32.totalorder %s15, 0
    %p121 = por %p119, %p120
    %p122 = scmp.ne.s32.totalorder %s110, %s111
    %p123 = scmp.eq.s32.totalorder %s16, 3
    %p124 = por %p122, %p123
    %p126 = scmp.ne.s32.totalorder %s111, %s125
    %p127 = scmp.eq.s32.totalorder %s16, 0
    %p128 = por %p126, %p127
    %s129 = ssub.s32 %s19, %s35
    %p130 = scmp.eq.s32.totalorder %s129, 0
    %s132 = sadd.s32 %s131, 1
    %s133 = scalar_select %p130, %s131, %s132
    %p136 = pneg %p130
    %p137 = scmp.eq.s32.totalorder %s10, 3
    %p138 = por %p136, %p137
    %p139 = scmp.ne.s32.totalorder %s131, %s134
    %p140 = scmp.eq.s32.totalorder %s10, 0
    %p141 = por %p139, %p140
    %p142 = scmp.ne.s32.totalorder %s131, %s134
    %p143 = scmp.eq.s32.totalorder %s15, 3
    %p144 = por %p142, %p143
    %p145 = scmp.ne.s32.totalorder %s134, %s135
    %p146 = scmp.eq.s32.totalorder %s15, 0
    %p147 = por %p145, %p146
    %p148 = scmp.ne.s32.totalorder %s134, %s135
    %p149 = scmp.eq.s32.totalorder %s16, 3
    %p150 = por %p148, %p149
    %p152 = scmp.ne.s32.totalorder %s135, %s151
    %p153 = scmp.eq.s32.totalorder %s16, 0
    %p154 = por %p152, %p153
    %s155 = ssub.s32 %s17, %s43
    %s156 = ssub.s32 %s18, %s39
    %s157 = sor.u32 %s155, %s156
    %s158 = ssub.s32 %s19, %s35
    %s159 = sor.u32 %s157, %s158
    %p160 = scmp.eq.s32.totalorder %s159, 0
    %s162 = sadd.s32 %s161, 1
    %s163 = scalar_select %p160, %s161, %s162
    %p166 = pneg %p160
    %p167 = scmp.eq.s32.totalorder %s10, 3
    %p168 = por %p166, %p167
    %p169 = scmp.ne.s32.totalorder %s161, %s164
    %p170 = scmp.eq.s32.totalorder %s10, 0
    %p171 = por %p169, %p170
    %p172 = scmp.ne.s32.totalorder %s161, %s164
    %p173 = scmp.eq.s32.totalorder %s15, 3
    %p174 = por %p172, %p173
    %p175 = scmp.ne.s32.totalorder %s164, %s165
    %p176 = scmp.eq.s32.totalorder %s15, 0
    %p177 = por %p175, %p176
    %p178 = scmp.ne.s32.totalorder %s164, %s165
    %p179 = scmp.eq.s32.totalorder %s16, 3
    %p180 = por %p178, %p179
    %p182 = scmp.ne.s32.totalorder %s165, %s181
    %p183 = scmp.eq.s32.totalorder %s16, 0
    %p184 = por %p182, %p183
    %p185 = scmp.le.s32.totalorder 1, %s10
    %p186 = scmp.lt.s32.totalorder %s10, 5
    %p187 = pnand %p185, %p186
    %p188 = pneg %p187
    // Predicated region
    $region9: #{tpu_custom_call.1} parent=5 // pred_check
      _
    $region10: #{tpu_custom_call.1} parent=5 // pred_check_branch
      %190 = sbr.rel (%p187) target = $region12
    $region11: #{tpu_custom_call.1} parent=5 // pred_region
      %s191 = ssub.s32 %s10, 1
      // Predicated region
      $region13: #{tpu_custom_call.1} parent=11 // pred_check
        %p192 = pneg %p121
      $region14: #{tpu_custom_call.1} parent=11 // pred_check_branch
        %194 = sbr.rel (%p192) target = $region16
      $region15: #{tpu_custom_call.1} parent=11 // pred_region
        _
      $region16: #{tpu_custom_call.1} parent=11 // pred_fallthru
        _
      // Predicated region
      $region17: #{tpu_custom_call.1} parent=11 // pred_check
        %p195 = pneg %p147
      $region18: #{tpu_custom_call.1} parent=11 // pred_check_branch
        %197 = sbr.rel (%p195) target = $region20
      $region19: #{tpu_custom_call.1} parent=11 // pred_region
        %p198 = scmp.lt.s32.totalorder %s23, 0
        %s199 = scalar_select %p198, %s23, 0
        %s200 = smul.addr %s199, 4
        %s201 = scalar_lea.vmem %s3, %s200
      $region20: #{tpu_custom_call.1} parent=11 // pred_fallthru
        _
    $region12: #{tpu_custom_call.1} parent=5 // pred_fallthru
      _
    %p202 = scmp.lt.s32.totalorder %s10, 4
    // Predicated region
    $region21: #{tpu_custom_call.1} parent=5 // pred_check
      %p203 = pneg %p202
    $region22: #{tpu_custom_call.1} parent=5 // pred_check_branch
      %205 = sbr.rel (%p203) target = $region24
    $region23: #{tpu_custom_call.1} parent=5 // pred_region
      // Predicated region
      $region25: #{tpu_custom_call.1} parent=23 // pred_check
        %p206 = pneg %p60
      $region26: #{tpu_custom_call.1} parent=23 // pred_check_branch
        %208 = sbr.rel (%p206) target = $region28
      $region27: #{tpu_custom_call.1} parent=23 // pred_region
        %s209 = smul.u32 8, %s18
        %s210 = ssub.s32 18, %s209
        %p211 = scmp.lt.s32.totalorder %s210, 8
        %s212 = scalar_select %p211, %s210, 8
        %s213 = smul.u32 8, %s212
        %s214 = smul.u32 %s213, 3
        %p215 = scmp.lt.s32.totalorder %s17, 1
        %s216 = scalar_select %p215, %s17, 1
        %p217 = scmp.lt.s32.totalorder %s209, 17
        %s218 = scalar_select %p217, %s209, 17
        %p219 = scmp.lt.s32.totalorder %s20, 0
        %s220 = scalar_select %p219, %s20, 0
        %s221 = smul.addr %s218, 3
        %s222 = sadd.s32 %s220, %s221
        %s223 = smul.addr %s216, 54
        %s224 = sadd.s32 %s222, %s223
        %s225 = smul.addr %s224, 8
        %s226 = scalar_lea.vmem %s0, %s225
        %s227 = smul.u32 8, %s18
        %s228 = ssub.s32 18, %s227
        %p229 = scmp.lt.s32.totalorder %s228, 8
        %s230 = scalar_select %p229, %s228, 8
        %s231 = smul.u32 8, %s230
        %s232 = smul.u32 %s231, 3
      $region28: #{tpu_custom_call.1} parent=23 // pred_fallthru
        _
      // Predicated region
      $region29: #{tpu_custom_call.1} parent=23 // pred_check
        %p233 = pneg %p94
      $region30: #{tpu_custom_call.1} parent=23 // pred_check_branch
        %235 = sbr.rel (%p233) target = $region32
      $region31: #{tpu_custom_call.1} parent=23 // pred_region
        %s236 = sadd.s32 %s18, 1
        %s237 = smul.u32 %s236, 4
        %s238 = smul.u32 2, %s237
        %p239 = scmp.lt.s32.totalorder %s17, 1
        %s240 = scalar_select %p239, %s17, 1
        %p241 = scmp.lt.s32.totalorder %s238, 17
        %s242 = scalar_select %p241, %s238, 17
        %p243 = scmp.lt.s32.totalorder %s20, 0
        %s244 = scalar_select %p243, %s20, 0
        %s245 = smul.addr %s242, 3
        %s246 = sadd.s32 %s244, %s245
        %s247 = smul.addr %s240, 54
        %s248 = sadd.s32 %s246, %s247
        %s249 = smul.addr %s248, 8
        %s250 = scalar_lea.vmem %s1, %s249
        %s251 = sadd.s32 %s18, 1
        %s252 = smul.u32 %s251, 4
        %s253 = smul.u32 2, %s252
      $region32: #{tpu_custom_call.1} parent=23 // pred_fallthru
        _
    $region24: #{tpu_custom_call.1} parent=5 // pred_fallthru
      _
    %p254 = scmp.le.s32.totalorder 1, %s10
    %p255 = scmp.lt.s32.totalorder %s10, 5
    %p256 = pnand %p254, %p255
    %p257 = pneg %p256
    // Predicated region
    $region33: #{tpu_custom_call.1} parent=5 // pred_check
      _
    $region34: #{tpu_custom_call.1} parent=5 // pred_check_branch
      %259 = sbr.rel (%p256) target = $region36
    $region35: #{tpu_custom_call.1} parent=5 // pred_region
      %s260 = ssub.s32 %s10, 1
      %s261 = smul.u32 8, %s22
      %s262 = ssub.s32 18, %s261
      %p263 = scmp.lt.s32.totalorder %s262, 8
      %s264 = scalar_select %p263, %s262, 8
      %s265 = smul.u32 8, %s264
      %s266 = smul.u32 %s265, 3
      %p267 = scmp.lt.s32.totalorder %s21, 1
      %s268 = scalar_select %p267, %s21, 1
      %p269 = scmp.lt.s32.totalorder %s261, 17
      %s270 = scalar_select %p269, %s261, 17
      %p271 = scmp.lt.s32.totalorder %s24, 0
      %s272 = scalar_select %p271, %s24, 0
      %s273 = smul.addr %s270, 3
      %s274 = sadd.s32 %s272, %s273
      %s275 = smul.addr %s268, 54
      %s276 = sadd.s32 %s274, %s275
      %s277 = smul.addr %s276, 8
      %s278 = scalar_lea.vmem %s0, %s277
      %p279 = pneg %p66
      %p280 = pneg %p63
      %s281 = sadd.s32 %s22, 1
      %s282 = smul.u32 %s281, 4
      %s283 = smul.u32 2, %s282
      %p284 = scmp.lt.s32.totalorder %s21, 1
      %s285 = scalar_select %p284, %s21, 1
      %p286 = scmp.lt.s32.totalorder %s283, 17
      %s287 = scalar_select %p286, %s283, 17
      %p288 = scmp.lt.s32.totalorder %s24, 0
      %s289 = scalar_select %p288, %s24, 0
      %s290 = smul.addr %s287, 3
      %s291 = sadd.s32 %s289, %s290
      %s292 = smul.addr %s285, 54
      %s293 = sadd.s32 %s291, %s292
      %s294 = smul.addr %s293, 8
      %s295 = scalar_lea.vmem %s1, %s294
      %p296 = pneg %p100
      %p297 = pneg %p97
      %p298 = pneg %p121
      %p299 = pneg %p118
      %p300 = scmp.lt.s32.totalorder %s23, 0
      %s301 = scalar_select %p300, %s23, 0
      %s302 = smul.addr %s301, 4
      %s303 = scalar_lea.vmem %s3, %s302
      %p304 = pneg %p147
      %p305 = pneg %p144
      %p306 = pneg %p177
      %p307 = pneg %p174
      %s308 = smul.u32 8, %s22
      %p309 = scmp.lt.s32.totalorder %s21, 1
      %s310 = scalar_select %p309, %s21, 1
      %p311 = scmp.lt.s32.totalorder %s308, 15
      %s312 = scalar_select %p311, %s308, 15
      %p313 = scmp.lt.s32.totalorder %s23, 0
      %s314 = scalar_select %p313, %s23, 0
      %s315 = smul.addr %s312, 2
      %s316 = sadd.s32 %s314, %s315
      %s317 = smul.addr %s310, 32
      %s318 = sadd.s32 %s316, %s317
      %s319 = smul.addr %s318, 8
      %s320 = scalar_lea.vmem %s4, %s319
      %s321 = smul.u32 8, %s22
      %s322 = ssub.s32 18, %s321
      %p323 = scmp.lt.s32.totalorder %s322, 8
      %s324 = scalar_select %p323, %s322, 8
      %s325 = smul.u32 8, %s324
      %s326 = smul.u32 %s325, 3
      %p327 = scmp.lt.s32.totalorder %s21, 1
      %s328 = scalar_select %p327, %s21, 1
      %p329 = scmp.lt.s32.totalorder %s321, 17
      %s330 = scalar_select %p329, %s321, 17
      %p331 = scmp.lt.s32.totalorder %s24, 0
      %s332 = scalar_select %p331, %s24, 0
      %s333 = smul.addr %s330, 3
      %s334 = sadd.s32 %s332, %s333
      %s335 = smul.addr %s328, 54
      %s336 = sadd.s32 %s334, %s335
      %s337 = smul.addr %s336, 8
      %s338 = scalar_lea.vmem %s0, %s337
      %s339 = smul.u32 8, %s22
      %s340 = ssub.s32 18, %s339
      %p341 = scmp.lt.s32.totalorder %s340, 8
      %s342 = scalar_select %p341, %s340, 8
      %s343 = smul.u32 8, %s342
      %s344 = smul.u32 %s343, 3
      %s345 = sadd.s32 %s22, 1
      %s346 = smul.u32 %s345, 4
      %s347 = smul.u32 2, %s346
      %p348 = scmp.lt.s32.totalorder %s21, 1
      %s349 = scalar_select %p348, %s21, 1
      %p350 = scmp.lt.s32.totalorder %s347, 17
      %s351 = scalar_select %p350, %s347, 17
      %p352 = scmp.lt.s32.totalorder %s24, 0
      %s353 = scalar_select %p352, %s24, 0
      %s354 = smul.addr %s351, 3
      %s355 = sadd.s32 %s353, %s354
      %s356 = smul.addr %s349, 54
      %s357 = sadd.s32 %s355, %s356
      %s358 = smul.addr %s357, 8
      %s359 = scalar_lea.vmem %s1, %s358
      %s360 = sadd.s32 %s22, 1
      %s361 = smul.u32 %s360, 4
      %s362 = smul.u32 2, %s361
      %p363 = scmp.lt.s32.totalorder %s23, 0
      %s364 = scalar_select %p363, %s23, 0
      %s365 = smul.addr %s364, 4
      %s366 = scalar_lea.vmem %s3, %s365
      %s367 = smul.u32 8, %s22
      %p368 = scmp.lt.s32.totalorder %s21, 1
      %s369 = scalar_select %p368, %s21, 1
      %p370 = scmp.lt.s32.totalorder %s367, 15
      %s371 = scalar_select %p370, %s367, 15
      %p372 = scmp.lt.s32.totalorder %s23, 0
      %s373 = scalar_select %p372, %s23, 0
      %s374 = smul.addr %s371, 2
      %s375 = sadd.s32 %s373, %s374
      %s376 = smul.addr %s369, 32
      %s377 = sadd.s32 %s375, %s376
      %s378 = smul.addr %s377, 8
      %s379 = scalar_lea.vmem %s4, %s378
      %s380 = smul.u32 8, %s22
      %p381 = scmp.eq.s32.totalorder %s24, 0
      // Predicated region
      $region37: #{tpu_custom_call.1} parent=35 // pred_check
        %p382 = pneg %p381
      $region38: #{tpu_custom_call.1} parent=35 // pred_check_branch
        %384 = sbr.rel (%p382) target = $region40
      $region39: #{tpu_custom_call.1} parent=35 // pred_region
        %vm385 = vcmask 64512
        %386 = vst.msk [vmem:[#allocation2] sm:$0xff] %vm385, 0.0
        %387 = vst.msk [vmem:[#allocation2 + $0x8] sm:$0xff] %vm385, 0.0
        %388 = vst.msk [vmem:[#allocation2 + $0x10] sm:$0xff] %vm385, 0.0
        %389 = vst.msk [vmem:[#allocation2 + $0x18] sm:$0xff] %vm385, 0.0
        %390 = vst.msk [vmem:[#allocation2 + $0x20] sm:$0xff] %vm385, 0.0
        %391 = vst.msk [vmem:[#allocation2 + $0x28] sm:$0xff] %vm385, 0.0
        %392 = vst.msk [vmem:[#allocation2 + $0x30] sm:$0xff] %vm385, 0.0
        %393 = vst.msk [vmem:[#allocation2 + $0x38] sm:$0xff] %vm385, 0.0
        %394 = vst.msk [vmem:[#allocation2 + $0x40] sm:$0xff] %vm385, 0.0
        %395 = vst.msk [vmem:[#allocation2 + $0x48] sm:$0xff] %vm385, 0.0
        %396 = vst.msk [vmem:[#allocation2 + $0x50] sm:$0xff] %vm385, 0.0
        %397 = vst.msk [vmem:[#allocation2 + $0x58] sm:$0xff] %vm385, 0.0
        %398 = vst.msk [vmem:[#allocation2 + $0x60] sm:$0xff] %vm385, 0.0
        %399 = vst.msk [vmem:[#allocation2 + $0x68] sm:$0xff] %vm385, 0.0
        %400 = vst.msk [vmem:[#allocation2 + $0x70] sm:$0xff] %vm385, 0.0
        %401 = vst.msk [vmem:[#allocation2 + $0x78] sm:$0xff] %vm385, 0.0
      $region40: #{tpu_custom_call.1} parent=35 // pred_fallthru
        _
      %v402 = vld [vmem:[%s338] sm:$0xff]
      %v403 = vld [vmem:[%s338 + $0x8] sm:$0xff]
      %v404 = vld [vmem:[%s338 + $0x10] sm:$0x3]
      %v405 = vld [vmem:[%s338 + $0x18] sm:$0xff]
      %v406 = vld [vmem:[%s338 + $0x20] sm:$0xff]
      %v407 = vld [vmem:[%s338 + $0x28] sm:$0x3]
      %v408 = vld [vmem:[%s338 + $0x30] sm:$0xff]
      %v409 = vld [vmem:[%s338 + $0x38] sm:$0xff]
      %v410 = vld [vmem:[%s338 + $0x40] sm:$0x3]
      %v411 = vld [vmem:[%s338 + $0x48] sm:$0xff]
      %v412 = vld [vmem:[%s338 + $0x50] sm:$0xff]
      %v413 = vld [vmem:[%s338 + $0x58] sm:$0x3]
      %v414 = vld [vmem:[%s338 + $0x60] sm:$0xff]
      %v415 = vld [vmem:[%s338 + $0x68] sm:$0xff]
      %v416 = vld [vmem:[%s338 + $0x70] sm:$0x3]
      %v417 = vld [vmem:[%s338 + $0x78] sm:$0xff]
      %v418 = vld [vmem:[%s338 + $0x80] sm:$0xff]
      %v419 = vld [vmem:[%s338 + $0x88] sm:$0x3]
      %v420 = vld [vmem:[%s338 + $0x90] sm:$0xff]
      %v421 = vld [vmem:[%s338 + $0x98] sm:$0xff]
      %v422 = vld [vmem:[%s338 + $0xa0] sm:$0x3]
      %v423 = vld [vmem:[%s338 + $0xa8] sm:$0xff]
      %v424 = vld [vmem:[%s338 + $0xb0] sm:$0xff]
      %v425 = vld [vmem:[%s338 + $0xb8] sm:$0x3]
      %v426 = vld [vmem:[%s359] sm:$0xff]
      %v427 = vld [vmem:[%s359 + $0x8] sm:$0xff]
      %v428 = vld [vmem:[%s359 + $0x10] sm:$0x3]
      %v429 = vld [vmem:[%s359 + $0x18] sm:$0xff]
      %v430 = vld [vmem:[%s359 + $0x20] sm:$0xff]
      %v431 = vld [vmem:[%s359 + $0x28] sm:$0x3]
      %v432 = vld [vmem:[%s2] sm:$0xff]
      %v433 = vld [vmem:[%s2 + $0x8] sm:$0x1]
      %v434 = vld [vmem:[%s366] sm:$0xf]
      %v435 = vperm.slane %v432, 0
      %v436 = vlaneseq
      %v437 = vshrl.u32 %v436, 7
      %439 = vset.pattern.permute.xlu0 %v437
      %440 = vperm.xlu0 %439, %v435
      %v441 = vpop.permute.xlu0 %440
      %v442 = vmul.f32 %v441, %v434
      %v443 = vperm.slane %v432, 1
      %v444 = vlaneseq
      %v445 = vshrl.u32 %v444, 7
      %447 = vset.pattern.permute.xlu0 %v445
      %448 = vperm.xlu0 %447, %v443
      %v449 = vpop.permute.xlu0 %448
      %v450 = vmul.f32 %v449, %v434
      %vm475 = vcmask 1046528
      %v476 = vrot.slane %v402, 1
      %v477 = vrot.slane %v403, 1
      %v478 = vsel %vm475, %v476, %v477
      %v479 = vrot.slane %v404, 1
      %v480 = vsel %vm475, %v477, %v479
      %v481 = vrot.slane %v405, 1
      %v482 = vrot.slane %v406, 1
      %v483 = vsel %vm475, %v481, %v482
      %v484 = vrot.slane %v407, 1
      %v485 = vsel %vm475, %v482, %v484
      %v486 = vrot.slane %v408, 1
      %v487 = vrot.slane %v409, 1
      %v488 = vsel %vm475, %v486, %v487
      %v489 = vrot.slane %v410, 1
      %v490 = vsel %vm475, %v487, %v489
      %v491 = vrot.slane %v411, 1
      %v492 = vrot.slane %v412, 1
      %v493 = vsel %vm475, %v491, %v492
      %v494 = vrot.slane %v413, 1
      %v495 = vsel %vm475, %v492, %v494
      %v496 = vrot.slane %v414, 1
      %v497 = vrot.slane %v415, 1
      %v498 = vsel %vm475, %v496, %v497
      %v499 = vrot.slane %v416, 1
      %v500 = vsel %vm475, %v497, %v499
      %v501 = vrot.slane %v417, 1
      %v502 = vrot.slane %v418, 1
      %v503 = vsel %vm475, %v501, %v502
      %v504 = vrot.slane %v419, 1
      %v505 = vsel %vm475, %v502, %v504
      %v506 = vrot.slane %v420, 1
      %v507 = vrot.slane %v421, 1
      %v508 = vsel %vm475, %v506, %v507
      %v509 = vrot.slane %v422, 1
      %v510 = vsel %vm475, %v507, %v509
      %v511 = vrot.slane %v423, 1
      %v512 = vrot.slane %v424, 1
      %v513 = vsel %vm475, %v511, %v512
      %v514 = vrot.slane %v425, 1
      %v515 = vsel %vm475, %v512, %v514
      %vm516 = vcmask 31744
      %v517 = vsel %vm516, %v478, 0
      %v519 = vsel %vm516, %v480, 0
      %v521 = vsel %vm516, %v483, 0
      %v523 = vsel %vm516, %v485, 0
      %v525 = vsel %vm516, %v488, 0
      %v527 = vsel %vm516, %v490, 0
      %v529 = vsel %vm516, %v493, 0
      %v531 = vsel %vm516, %v495, 0
      %v533 = vsel %vm516, %v498, 0
      %v535 = vsel %vm516, %v500, 0
      %v537 = vsel %vm516, %v503, 0
      %v539 = vsel %vm516, %v505, 0
      %v541 = vsel %vm516, %v508, 0
      %v543 = vsel %vm516, %v510, 0
      %v545 = vsel %vm516, %v513, 0
      %v547 = vsel %vm516, %v515, 0
      %vm549 = vcmask 1043456
      %v551 = vsel %vm549, %v450, 0
      %553 = vmatpush.msra.mxu0 0.0
      %554 = vmatpush.msra.mxu0 0.0
      %555 = vmatpush.msra.mxu0 0.0
      %556 = vmatpush.msra.mxu0 0.0
      %557 = vmatpush.msra.mxu0 0.0
      %558 = vmatpush.msra.mxu0 0.0
      %559 = vmatpush.msra.mxu0 0.0
      %560 = vmatpush.msra.mxu0 0.0
      %561 = vmatpush.msra.mxu0 0.0
      %562 = vmatpush.msra.mxu0 0.0
      %563 = vmatpush.msra.mxu0 0.0
      %564 = vmatpush.msra.mxu0 0.0
      %565 = vmatpush.msra.mxu0 0.0
      %566 = vmatpush.msra.mxu0 0.0
      %567 = vmatpush.msra.mxu0 0.0
      %568 = vmatpush.msra.mxu0 %v551
      %569 = vmatmul.f32.gmra.mxu0 %v517
      %v570 = vpop.f32.mrf.mxu0
      %v571 = vadd.f32 0.0, %v570
      %572 = vmatmul.f32.gmra.mxu0 %v519
      %v573 = vpop.f32.mrf.mxu0
      %v574 = vadd.f32 0.0, %v573
      %575 = vmatmul.f32.gmra.mxu0 %v521
      %v576 = vpop.f32.mrf.mxu0
      %v577 = vadd.f32 0.0, %v576
      %578 = vmatmul.f32.gmra.mxu0 %v523
      %v579 = vpop.f32.mrf.mxu0
      %v580 = vadd.f32 0.0, %v579
      %581 = vmatmul.f32.gmra.mxu0 %v525
      %v582 = vpop.f32.mrf.mxu0
      %v583 = vadd.f32 0.0, %v582
      %584 = vmatmul.f32.gmra.mxu0 %v527
      %v585 = vpop.f32.mrf.mxu0
      %v586 = vadd.f32 0.0, %v585
      %587 = vmatmul.f32.gmra.mxu0 %v529
      %v588 = vpop.f32.mrf.mxu0
      %v589 = vadd.f32 0.0, %v588
      %590 = vmatmul.f32.gmra.mxu0 %v531
      %v591 = vpop.f32.mrf.mxu0
      %v592 = vadd.f32 0.0, %v591
      %593 = vmatmul.f32.gmra.mxu0 %v533
      %v594 = vpop.f32.mrf.mxu0
      %v595 = vadd.f32 0.0, %v594
      %596 = vmatmul.f32.gmra.mxu0 %v535
      %v597 = vpop.f32.mrf.mxu0
      %v598 = vadd.f32 0.0, %v597
      %599 = vmatmul.f32.gmra.mxu0 %v537
      %v600 = vpop.f32.mrf.mxu0
      %v601 = vadd.f32 0.0, %v600
      %602 = vmatmul.f32.gmra.mxu0 %v539
      %v603 = vpop.f32.mrf.mxu0
      %v604 = vadd.f32 0.0, %v603
      %605 = vmatmul.f32.gmra.mxu0 %v541
      %v606 = vpop.f32.mrf.mxu0
      %v607 = vadd.f32 0.0, %v606
      %608 = vmatmul.f32.gmra.mxu0 %v543
      %v609 = vpop.f32.mrf.mxu0
      %v610 = vadd.f32 0.0, %v609
      %611 = vmatmul.f32.gmra.mxu0 %v545
      %v612 = vpop.f32.mrf.mxu0
      %v613 = vadd.f32 0.0, %v612
      %614 = vmatmul.f32.gmra.mxu0 %v547
      %v615 = vpop.f32.mrf.mxu0
      %v616 = vadd.f32 0.0, %v615
      %617 = vdwg.mxu0
      %v618 = vsel %vm516, %v402, 0
      %v620 = vsel %vm516, %v403, 0
      %v622 = vsel %vm516, %v405, 0
      %v624 = vsel %vm516, %v406, 0
      %v626 = vsel %vm516, %v408, 0
      %v628 = vsel %vm516, %v409, 0
      %v630 = vsel %vm516, %v411, 0
      %v632 = vsel %vm516, %v412, 0
      %v634 = vsel %vm516, %v414, 0
      %v636 = vsel %vm516, %v415, 0
      %v638 = vsel %vm516, %v417, 0
      %v640 = vsel %vm516, %v418, 0
      %v642 = vsel %vm516, %v420, 0
      %v644 = vsel %vm516, %v421, 0
      %v646 = vsel %vm516, %v423, 0
      %v648 = vsel %vm516, %v424, 0
      %v651 = vsel %vm549, %v442, 0
      %653 = vmatpush.msra.mxu0 0.0
      %654 = vmatpush.msra.mxu0 0.0
      %655 = vmatpush.msra.mxu0 0.0
      %656 = vmatpush.msra.mxu0 0.0
      %657 = vmatpush.msra.mxu0 0.0
      %658 = vmatpush.msra.mxu0 0.0
      %659 = vmatpush.msra.mxu0 0.0
      %660 = vmatpush.msra.mxu0 0.0
      %661 = vmatpush.msra.mxu0 0.0
      %662 = vmatpush.msra.mxu0 0.0
      %663 = vmatpush.msra.mxu0 0.0
      %664 = vmatpush.msra.mxu0 0.0
      %665 = vmatpush.msra.mxu0 0.0
      %666 = vmatpush.msra.mxu0 0.0
      %667 = vmatpush.msra.mxu0 0.0
      %668 = vmatpush.msra.mxu0 %v651
      %669 = vmatmul.f32.gmra.mxu0 %v618
      %v670 = vpop.f32.mrf.mxu0
      %v671 = vadd.f32 %v571, %v670
      %672 = vmatmul.f32.gmra.mxu0 %v620
      %v673 = vpop.f32.mrf.mxu0
      %v674 = vadd.f32 %v574, %v673
      %675 = vmatmul.f32.gmra.mxu0 %v622
      %v676 = vpop.f32.mrf.mxu0
      %v677 = vadd.f32 %v577, %v676
      %678 = vmatmul.f32.gmra.mxu0 %v624
      %v679 = vpop.f32.mrf.mxu0
      %v680 = vadd.f32 %v580, %v679
      %681 = vmatmul.f32.gmra.mxu0 %v626
      %v682 = vpop.f32.mrf.mxu0
      %v683 = vadd.f32 %v583, %v682
      %684 = vmatmul.f32.gmra.mxu0 %v628
      %v685 = vpop.f32.mrf.mxu0
      %v686 = vadd.f32 %v586, %v685
      %687 = vmatmul.f32.gmra.mxu0 %v630
      %v688 = vpop.f32.mrf.mxu0
      %v689 = vadd.f32 %v589, %v688
      %690 = vmatmul.f32.gmra.mxu0 %v632
      %v691 = vpop.f32.mrf.mxu0
      %v692 = vadd.f32 %v592, %v691
      %693 = vmatmul.f32.gmra.mxu0 %v634
      %v694 = vpop.f32.mrf.mxu0
      %v695 = vadd.f32 %v595, %v694
      %696 = vmatmul.f32.gmra.mxu0 %v636
      %v697 = vpop.f32.mrf.mxu0
      %v698 = vadd.f32 %v598, %v697
      %699 = vmatmul.f32.gmra.mxu0 %v638
      %v700 = vpop.f32.mrf.mxu0
      %v701 = vadd.f32 %v601, %v700
      %702 = vmatmul.f32.gmra.mxu0 %v640
      %v703 = vpop.f32.mrf.mxu0
      %v704 = vadd.f32 %v604, %v703
      %705 = vmatmul.f32.gmra.mxu0 %v642
      %v706 = vpop.f32.mrf.mxu0
      %v707 = vadd.f32 %v607, %v706
      %708 = vmatmul.f32.gmra.mxu0 %v644
      %v709 = vpop.f32.mrf.mxu0
      %v710 = vadd.f32 %v610, %v709
      %711 = vmatmul.f32.gmra.mxu0 %v646
      %v712 = vpop.f32.mrf.mxu0
      %v713 = vadd.f32 %v613, %v712
      %714 = vmatmul.f32.gmra.mxu0 %v648
      %v715 = vpop.f32.mrf.mxu0
      %v716 = vadd.f32 %v616, %v715
      %717 = vdwg.mxu0
      %v718 = vperm.slane %v432, 2
      %v719 = vlaneseq
      %v720 = vshrl.u32 %v719, 7
      %722 = vset.pattern.permute.xlu0 %v720
      %723 = vperm.xlu0 %722, %v718
      %v724 = vpop.permute.xlu0 %723
      %v725 = vmul.f32 %v724, %v434
      %vm726 = vcmask 1045504
      %v727 = vrot.slane %v402, 2
      %v728 = vrot.slane %v403, 2
      %v729 = vsel %vm726, %v727, %v728
      %v730 = vrot.slane %v404, 2
      %v731 = vsel %vm726, %v728, %v730
      %v732 = vrot.slane %v405, 2
      %v733 = vrot.slane %v406, 2
      %v734 = vsel %vm726, %v732, %v733
      %v735 = vrot.slane %v407, 2
      %v736 = vsel %vm726, %v733, %v735
      %v737 = vrot.slane %v408, 2
      %v738 = vrot.slane %v409, 2
      %v739 = vsel %vm726, %v737, %v738
      %v740 = vrot.slane %v410, 2
      %v741 = vsel %vm726, %v738, %v740
      %v742 = vrot.slane %v411, 2
      %v743 = vrot.slane %v412, 2
      %v744 = vsel %vm726, %v742, %v743
      %v745 = vrot.slane %v413, 2
      %v746 = vsel %vm726, %v743, %v745
      %v747 = vrot.slane %v414, 2
      %v748 = vrot.slane %v415, 2
      %v749 = vsel %vm726, %v747, %v748
      %v750 = vrot.slane %v416, 2
      %v751 = vsel %vm726, %v748, %v750
      %v752 = vrot.slane %v417, 2
      %v753 = vrot.slane %v418, 2
      %v754 = vsel %vm726, %v752, %v753
      %v755 = vrot.slane %v419, 2
      %v756 = vsel %vm726, %v753, %v755
      %v757 = vrot.slane %v420, 2
      %v758 = vrot.slane %v421, 2
      %v759 = vsel %vm726, %v757, %v758
      %v760 = vrot.slane %v422, 2
      %v761 = vsel %vm726, %v758, %v760
      %v762 = vrot.slane %v423, 2
      %v763 = vrot.slane %v424, 2
      %v764 = vsel %vm726, %v762, %v763
      %v765 = vrot.slane %v425, 2
      %v766 = vsel %vm726, %v763, %v765
      %v767 = vsel %vm516, %v729, 0
      %v769 = vsel %vm516, %v731, 0
      %v771 = vsel %vm516, %v734, 0
      %v773 = vsel %vm516, %v736, 0
      %v775 = vsel %vm516, %v739, 0
      %v777 = vsel %vm516, %v741, 0
      %v779 = vsel %vm516, %v744, 0
      %v781 = vsel %vm516, %v746, 0
      %v783 = vsel %vm516, %v749, 0
      %v785 = vsel %vm516, %v751, 0
      %v787 = vsel %vm516, %v754, 0
      %v789 = vsel %vm516, %v756, 0
      %v791 = vsel %vm516, %v759, 0
      %v793 = vsel %vm516, %v761, 0
      %v795 = vsel %vm516, %v764, 0
      %v797 = vsel %vm516, %v766, 0
      %v800 = vsel %vm549, %v725, 0
      %802 = vmatpush.msra.mxu0 0.0
      %803 = vmatpush.msra.mxu0 0.0
      %804 = vmatpush.msra.mxu0 0.0
      %805 = vmatpush.msra.mxu0 0.0
      %806 = vmatpush.msra.mxu0 0.0
      %807 = vmatpush.msra.mxu0 0.0
      %808 = vmatpush.msra.mxu0 0.0
      %809 = vmatpush.msra.mxu0 0.0
      %810 = vmatpush.msra.mxu0 0.0
      %811 = vmatpush.msra.mxu0 0.0
      %812 = vmatpush.msra.mxu0 0.0
      %813 = vmatpush.msra.mxu0 0.0
      %814 = vmatpush.msra.mxu0 0.0
      %815 = vmatpush.msra.mxu0 0.0
      %816 = vmatpush.msra.mxu0 0.0
      %817 = vmatpush.msra.mxu0 %v800
      %818 = vmatmul.f32.gmra.mxu0 %v767
      %v819 = vpop.f32.mrf.mxu0
      %v820 = vadd.f32 0.0, %v819
      %821 = vmatmul.f32.gmra.mxu0 %v769
      %v822 = vpop.f32.mrf.mxu0
      %v823 = vadd.f32 0.0, %v822
      %824 = vmatmul.f32.gmra.mxu0 %v771
      %v825 = vpop.f32.mrf.mxu0
      %v826 = vadd.f32 0.0, %v825
      %827 = vmatmul.f32.gmra.mxu0 %v773
      %v828 = vpop.f32.mrf.mxu0
      %v829 = vadd.f32 0.0, %v828
      %830 = vmatmul.f32.gmra.mxu0 %v775
      %v831 = vpop.f32.mrf.mxu0
      %v832 = vadd.f32 0.0, %v831
      %833 = vmatmul.f32.gmra.mxu0 %v777
      %v834 = vpop.f32.mrf.mxu0
      %v835 = vadd.f32 0.0, %v834
      %836 = vmatmul.f32.gmra.mxu0 %v779
      %v837 = vpop.f32.mrf.mxu0
      %v838 = vadd.f32 0.0, %v837
      %839 = vmatmul.f32.gmra.mxu0 %v781
      %v840 = vpop.f32.mrf.mxu0
      %v841 = vadd.f32 0.0, %v840
      %842 = vmatmul.f32.gmra.mxu0 %v783
      %v843 = vpop.f32.mrf.mxu0
      %v844 = vadd.f32 0.0, %v843
      %845 = vmatmul.f32.gmra.mxu0 %v785
      %v846 = vpop.f32.mrf.mxu0
      %v847 = vadd.f32 0.0, %v846
      %848 = vmatmul.f32.gmra.mxu0 %v787
      %v849 = vpop.f32.mrf.mxu0
      %v850 = vadd.f32 0.0, %v849
      %851 = vmatmul.f32.gmra.mxu0 %v789
      %v852 = vpop.f32.mrf.mxu0
      %v853 = vadd.f32 0.0, %v852
      %854 = vmatmul.f32.gmra.mxu0 %v791
      %v855 = vpop.f32.mrf.mxu0
      %v856 = vadd.f32 0.0, %v855
      %857 = vmatmul.f32.gmra.mxu0 %v793
      %v858 = vpop.f32.mrf.mxu0
      %v859 = vadd.f32 0.0, %v858
      %860 = vmatmul.f32.gmra.mxu0 %v795
      %v861 = vpop.f32.mrf.mxu0
      %v862 = vadd.f32 0.0, %v861
      %863 = vmatmul.f32.gmra.mxu0 %v797
      %v864 = vpop.f32.mrf.mxu0
      %v865 = vadd.f32 0.0, %v864
      %866 = vdwg.mxu0
      %v867 = vadd.f32 %v671, %v820
      %v868 = vadd.f32 %v674, %v823
      %v869 = vadd.f32 %v677, %v826
      %v870 = vadd.f32 %v680, %v829
      %v871 = vadd.f32 %v683, %v832
      %v872 = vadd.f32 %v686, %v835
      %v873 = vadd.f32 %v689, %v838
      %v874 = vadd.f32 %v692, %v841
      %v875 = vadd.f32 %v695, %v844
      %v876 = vadd.f32 %v698, %v847
      %v877 = vadd.f32 %v701, %v850
      %v878 = vadd.f32 %v704, %v853
      %v879 = vadd.f32 %v707, %v856
      %v880 = vadd.f32 %v710, %v859
      %v881 = vadd.f32 %v713, %v862
      %v882 = vadd.f32 %v716, %v865
      %v883 = vperm.slane %v432, 3
      %v884 = vlaneseq
      %v885 = vshrl.u32 %v884, 7
      %887 = vset.pattern.permute.xlu0 %v885
      %888 = vperm.xlu0 %887, %v883
      %v889 = vpop.permute.xlu0 %888
      %v890 = vmul.f32 %v889, %v434
      %v892 = vsel %vm516, %v426, 0
      %v895 = vsel %vm516, %v427, 0
      %v898 = vsel %vm549, %v890, 0
      %900 = vmatpush.msra.mxu0 0.0
      %901 = vmatpush.msra.mxu0 0.0
      %902 = vmatpush.msra.mxu0 0.0
      %903 = vmatpush.msra.mxu0 0.0
      %904 = vmatpush.msra.mxu0 0.0
      %905 = vmatpush.msra.mxu0 0.0
      %906 = vmatpush.msra.mxu0 0.0
      %907 = vmatpush.msra.mxu0 0.0
      %908 = vmatpush.msra.mxu0 0.0
      %909 = vmatpush.msra.mxu0 0.0
      %910 = vmatpush.msra.mxu0 0.0
      %911 = vmatpush.msra.mxu0 0.0
      %912 = vmatpush.msra.mxu0 0.0
      %913 = vmatpush.msra.mxu0 0.0
      %914 = vmatpush.msra.mxu0 0.0
      %915 = vmatpush.msra.mxu0 %v898
      %916 = vmatmul.f32.gmra.mxu0 %v622
      %v917 = vpop.f32.mrf.mxu0
      %v918 = vadd.f32 0.0, %v917
      %919 = vmatmul.f32.gmra.mxu0 %v624
      %v920 = vpop.f32.mrf.mxu0
      %v921 = vadd.f32 0.0, %v920
      %922 = vmatmul.f32.gmra.mxu0 %v626
      %v923 = vpop.f32.mrf.mxu0
      %v924 = vadd.f32 0.0, %v923
      %925 = vmatmul.f32.gmra.mxu0 %v628
      %v926 = vpop.f32.mrf.mxu0
      %v927 = vadd.f32 0.0, %v926
      %928 = vmatmul.f32.gmra.mxu0 %v630
      %v929 = vpop.f32.mrf.mxu0
      %v930 = vadd.f32 0.0, %v929
      %931 = vmatmul.f32.gmra.mxu0 %v632
      %v932 = vpop.f32.mrf.mxu0
      %v933 = vadd.f32 0.0, %v932
      %934 = vmatmul.f32.gmra.mxu0 %v634
      %v935 = vpop.f32.mrf.mxu0
      %v936 = vadd.f32 0.0, %v935
      %937 = vmatmul.f32.gmra.mxu0 %v636
      %v938 = vpop.f32.mrf.mxu0
      %v939 = vadd.f32 0.0, %v938
      %940 = vmatmul.f32.gmra.mxu0 %v638
      %v941 = vpop.f32.mrf.mxu0
      %v942 = vadd.f32 0.0, %v941
      %943 = vmatmul.f32.gmra.mxu0 %v640
      %v944 = vpop.f32.mrf.mxu0
      %v945 = vadd.f32 0.0, %v944
      %946 = vmatmul.f32.gmra.mxu0 %v642
      %v947 = vpop.f32.mrf.mxu0
      %v948 = vadd.f32 0.0, %v947
      %949 = vmatmul.f32.gmra.mxu0 %v644
      %v950 = vpop.f32.mrf.mxu0
      %v951 = vadd.f32 0.0, %v950
      %952 = vmatmul.f32.gmra.mxu0 %v646
      %v953 = vpop.f32.mrf.mxu0
      %v954 = vadd.f32 0.0, %v953
      %955 = vmatmul.f32.gmra.mxu0 %v648
      %v956 = vpop.f32.mrf.mxu0
      %v957 = vadd.f32 0.0, %v956
      %958 = vmatmul.f32.gmra.mxu0 %v892
      %v959 = vpop.f32.mrf.mxu0
      %v960 = vadd.f32 0.0, %v959
      %961 = vmatmul.f32.gmra.mxu0 %v895
      %v962 = vpop.f32.mrf.mxu0
      %v963 = vadd.f32 0.0, %v962
      %964 = vdwg.mxu0
      %v965 = vadd.f32 %v867, %v918
      %v966 = vadd.f32 %v868, %v921
      %v967 = vadd.f32 %v869, %v924
      %v968 = vadd.f32 %v870, %v927
      %v969 = vadd.f32 %v871, %v930
      %v970 = vadd.f32 %v872, %v933
      %v971 = vadd.f32 %v873, %v936
      %v972 = vadd.f32 %v874, %v939
      %v973 = vadd.f32 %v875, %v942
      %v974 = vadd.f32 %v876, %v945
      %v975 = vadd.f32 %v877, %v948
      %v976 = vadd.f32 %v878, %v951
      %v977 = vadd.f32 %v879, %v954
      %v978 = vadd.f32 %v880, %v957
      %v979 = vadd.f32 %v881, %v960
      %v980 = vadd.f32 %v882, %v963
      %v981 = vperm.slane %v432, 4
      %v982 = vlaneseq
      %v983 = vshrl.u32 %v982, 7
      %985 = vset.pattern.permute.xlu0 %v983
      %986 = vperm.xlu0 %985, %v981
      %v987 = vpop.permute.xlu0 %986
      %v988 = vmul.f32 %v987, %v434
      %v990 = vrot.slane %v426, 1
      %v991 = vrot.slane %v427, 1
      %v992 = vsel %vm475, %v990, %v991
      %v993 = vrot.slane %v428, 1
      %v994 = vsel %vm475, %v991, %v993
      %v995 = vsel %vm516, %v992, 0
      %v997 = vsel %vm516, %v994, 0
      %v1000 = vsel %vm549, %v988, 0
      %1002 = vmatpush.msra.mxu0 0.0
      %1003 = vmatpush.msra.mxu0 0.0
      %1004 = vmatpush.msra.mxu0 0.0
      %1005 = vmatpush.msra.mxu0 0.0
      %1006 = vmatpush.msra.mxu0 0.0
      %1007 = vmatpush.msra.mxu0 0.0
      %1008 = vmatpush.msra.mxu0 0.0
      %1009 = vmatpush.msra.mxu0 0.0
      %1010 = vmatpush.msra.mxu0 0.0
      %1011 = vmatpush.msra.mxu0 0.0
      %1012 = vmatpush.msra.mxu0 0.0
      %1013 = vmatpush.msra.mxu0 0.0
      %1014 = vmatpush.msra.mxu0 0.0
      %1015 = vmatpush.msra.mxu0 0.0
      %1016 = vmatpush.msra.mxu0 0.0
      %1017 = vmatpush.msra.mxu0 %v1000
      %1018 = vmatmul.f32.gmra.mxu0 %v521
      %v1019 = vpop.f32.mrf.mxu0
      %v1020 = vadd.f32 0.0, %v1019
      %1021 = vmatmul.f32.gmra.mxu0 %v523
      %v1022 = vpop.f32.mrf.mxu0
      %v1023 = vadd.f32 0.0, %v1022
      %1024 = vmatmul.f32.gmra.mxu0 %v525
      %v1025 = vpop.f32.mrf.mxu0
      %v1026 = vadd.f32 0.0, %v1025
      %1027 = vmatmul.f32.gmra.mxu0 %v527
      %v1028 = vpop.f32.mrf.mxu0
      %v1029 = vadd.f32 0.0, %v1028
      %1030 = vmatmul.f32.gmra.mxu0 %v529
      %v1031 = vpop.f32.mrf.mxu0
      %v1032 = vadd.f32 0.0, %v1031
      %1033 = vmatmul.f32.gmra.mxu0 %v531
      %v1034 = vpop.f32.mrf.mxu0
      %v1035 = vadd.f32 0.0, %v1034
      %1036 = vmatmul.f32.gmra.mxu0 %v533
      %v1037 = vpop.f32.mrf.mxu0
      %v1038 = vadd.f32 0.0, %v1037
      %1039 = vmatmul.f32.gmra.mxu0 %v535
      %v1040 = vpop.f32.mrf.mxu0
      %v1041 = vadd.f32 0.0, %v1040
      %1042 = vmatmul.f32.gmra.mxu0 %v537
      %v1043 = vpop.f32.mrf.mxu0
      %v1044 = vadd.f32 0.0, %v1043
      %1045 = vmatmul.f32.gmra.mxu0 %v539
      %v1046 = vpop.f32.mrf.mxu0
      %v1047 = vadd.f32 0.0, %v1046
      %1048 = vmatmul.f32.gmra.mxu0 %v541
      %v1049 = vpop.f32.mrf.mxu0
      %v1050 = vadd.f32 0.0, %v1049
      %1051 = vmatmul.f32.gmra.mxu0 %v543
      %v1052 = vpop.f32.mrf.mxu0
      %v1053 = vadd.f32 0.0, %v1052
      %1054 = vmatmul.f32.gmra.mxu0 %v545
      %v1055 = vpop.f32.mrf.mxu0
      %v1056 = vadd.f32 0.0, %v1055
      %1057 = vmatmul.f32.gmra.mxu0 %v547
      %v1058 = vpop.f32.mrf.mxu0
      %v1059 = vadd.f32 0.0, %v1058
      %1060 = vmatmul.f32.gmra.mxu0 %v995
      %v1061 = vpop.f32.mrf.mxu0
      %v1062 = vadd.f32 0.0, %v1061
      %1063 = vmatmul.f32.gmra.mxu0 %v997
      %v1064 = vpop.f32.mrf.mxu0
      %v1065 = vadd.f32 0.0, %v1064
      %1066 = vdwg.mxu0
      %v1067 = vadd.f32 %v965, %v1020
      %v1068 = vadd.f32 %v966, %v1023
      %v1069 = vadd.f32 %v967, %v1026
      %v1070 = vadd.f32 %v968, %v1029
      %v1071 = vadd.f32 %v969, %v1032
      %v1072 = vadd.f32 %v970, %v1035
      %v1073 = vadd.f32 %v971, %v1038
      %v1074 = vadd.f32 %v972, %v1041
      %v1075 = vadd.f32 %v973, %v1044
      %v1076 = vadd.f32 %v974, %v1047
      %v1077 = vadd.f32 %v975, %v1050
      %v1078 = vadd.f32 %v976, %v1053
      %v1079 = vadd.f32 %v977, %v1056
      %v1080 = vadd.f32 %v978, %v1059
      %v1081 = vadd.f32 %v979, %v1062
      %v1082 = vadd.f32 %v980, %v1065
      %v1083 = vperm.slane %v432, 5
      %v1084 = vlaneseq
      %v1085 = vshrl.u32 %v1084, 7
      %1087 = vset.pattern.permute.xlu0 %v1085
      %1088 = vperm.xlu0 %1087, %v1083
      %v1089 = vpop.permute.xlu0 %1088
      %v1090 = vmul.f32 %v1089, %v434
      %v1091 = vrot.slane %v426, 2
      %v1092 = vrot.slane %v427, 2
      %v1093 = vsel %vm726, %v1091, %v1092
      %v1094 = vrot.slane %v428, 2
      %v1095 = vsel %vm726, %v1092, %v1094
      %v1096 = vsel %vm516, %v1093, 0
      %v1098 = vsel %vm516, %v1095, 0
      %v1101 = vsel %vm549, %v1090, 0
      %1103 = vmatpush.msra.mxu0 0.0
      %1104 = vmatpush.msra.mxu0 0.0
      %1105 = vmatpush.msra.mxu0 0.0
      %1106 = vmatpush.msra.mxu0 0.0
      %1107 = vmatpush.msra.mxu0 0.0
      %1108 = vmatpush.msra.mxu0 0.0
      %1109 = vmatpush.msra.mxu0 0.0
      %1110 = vmatpush.msra.mxu0 0.0
      %1111 = vmatpush.msra.mxu0 0.0
      %1112 = vmatpush.msra.mxu0 0.0
      %1113 = vmatpush.msra.mxu0 0.0
      %1114 = vmatpush.msra.mxu0 0.0
      %1115 = vmatpush.msra.mxu0 0.0
      %1116 = vmatpush.msra.mxu0 0.0
      %1117 = vmatpush.msra.mxu0 0.0
      %1118 = vmatpush.msra.mxu0 %v1101
      %1119 = vmatmul.f32.gmra.mxu0 %v771
      %v1120 = vpop.f32.mrf.mxu0
      %v1121 = vadd.f32 0.0, %v1120
      %1122 = vmatmul.f32.gmra.mxu0 %v773
      %v1123 = vpop.f32.mrf.mxu0
      %v1124 = vadd.f32 0.0, %v1123
      %1125 = vmatmul.f32.gmra.mxu0 %v775
      %v1126 = vpop.f32.mrf.mxu0
      %v1127 = vadd.f32 0.0, %v1126
      %1128 = vmatmul.f32.gmra.mxu0 %v777
      %v1129 = vpop.f32.mrf.mxu0
      %v1130 = vadd.f32 0.0, %v1129
      %1131 = vmatmul.f32.gmra.mxu0 %v779
      %v1132 = vpop.f32.mrf.mxu0
      %v1133 = vadd.f32 0.0, %v1132
      %1134 = vmatmul.f32.gmra.mxu0 %v781
      %v1135 = vpop.f32.mrf.mxu0
      %v1136 = vadd.f32 0.0, %v1135
      %1137 = vmatmul.f32.gmra.mxu0 %v783
      %v1138 = vpop.f32.mrf.mxu0
      %v1139 = vadd.f32 0.0, %v1138
      %1140 = vmatmul.f32.gmra.mxu0 %v785
      %v1141 = vpop.f32.mrf.mxu0
      %v1142 = vadd.f32 0.0, %v1141
      %1143 = vmatmul.f32.gmra.mxu0 %v787
      %v1144 = vpop.f32.mrf.mxu0
      %v1145 = vadd.f32 0.0, %v1144
      %1146 = vmatmul.f32.gmra.mxu0 %v789
      %v1147 = vpop.f32.mrf.mxu0
      %v1148 = vadd.f32 0.0, %v1147
      %1149 = vmatmul.f32.gmra.mxu0 %v791
      %v1150 = vpop.f32.mrf.mxu0
      %v1151 = vadd.f32 0.0, %v1150
      %1152 = vmatmul.f32.gmra.mxu0 %v793
      %v1153 = vpop.f32.mrf.mxu0
      %v1154 = vadd.f32 0.0, %v1153
      %1155 = vmatmul.f32.gmra.mxu0 %v795
      %v1156 = vpop.f32.mrf.mxu0
      %v1157 = vadd.f32 0.0, %v1156
      %1158 = vmatmul.f32.gmra.mxu0 %v797
      %v1159 = vpop.f32.mrf.mxu0
      %v1160 = vadd.f32 0.0, %v1159
      %1161 = vmatmul.f32.gmra.mxu0 %v1096
      %v1162 = vpop.f32.mrf.mxu0
      %v1163 = vadd.f32 0.0, %v1162
      %1164 = vmatmul.f32.gmra.mxu0 %v1098
      %v1165 = vpop.f32.mrf.mxu0
      %v1166 = vadd.f32 0.0, %v1165
      %1167 = vdwg.mxu0
      %v1168 = vadd.f32 %v1067, %v1121
      %v1169 = vadd.f32 %v1068, %v1124
      %v1170 = vadd.f32 %v1069, %v1127
      %v1171 = vadd.f32 %v1070, %v1130
      %v1172 = vadd.f32 %v1071, %v1133
      %v1173 = vadd.f32 %v1072, %v1136
      %v1174 = vadd.f32 %v1073, %v1139
      %v1175 = vadd.f32 %v1074, %v1142
      %v1176 = vadd.f32 %v1075, %v1145
      %v1177 = vadd.f32 %v1076, %v1148
      %v1178 = vadd.f32 %v1077, %v1151
      %v1179 = vadd.f32 %v1078, %v1154
      %v1180 = vadd.f32 %v1079, %v1157
      %v1181 = vadd.f32 %v1080, %v1160
      %v1182 = vadd.f32 %v1081, %v1163
      %v1183 = vadd.f32 %v1082, %v1166
      %v1184 = vperm.slane %v432, 6
      %v1185 = vlaneseq
      %v1186 = vshrl.u32 %v1185, 7
      %1188 = vset.pattern.permute.xlu0 %v1186
      %1189 = vperm.xlu0 %1188, %v1184
      %v1190 = vpop.permute.xlu0 %1189
      %v1191 = vmul.f32 %v1190, %v434
      %v1193 = vsel %vm516, %v429, 0
      %v1196 = vsel %vm516, %v430, 0
      %v1199 = vsel %vm549, %v1191, 0
      %1201 = vmatpush.msra.mxu0 0.0
      %1202 = vmatpush.msra.mxu0 0.0
      %1203 = vmatpush.msra.mxu0 0.0
      %1204 = vmatpush.msra.mxu0 0.0
      %1205 = vmatpush.msra.mxu0 0.0
      %1206 = vmatpush.msra.mxu0 0.0
      %1207 = vmatpush.msra.mxu0 0.0
      %1208 = vmatpush.msra.mxu0 0.0
      %1209 = vmatpush.msra.mxu0 0.0
      %1210 = vmatpush.msra.mxu0 0.0
      %1211 = vmatpush.msra.mxu0 0.0
      %1212 = vmatpush.msra.mxu0 0.0
      %1213 = vmatpush.msra.mxu0 0.0
      %1214 = vmatpush.msra.mxu0 0.0
      %1215 = vmatpush.msra.mxu0 0.0
      %1216 = vmatpush.msra.mxu0 %v1199
      %1217 = vmatmul.f32.gmra.mxu0 %v626
      %v1218 = vpop.f32.mrf.mxu0
      %v1219 = vadd.f32 0.0, %v1218
      %1220 = vmatmul.f32.gmra.mxu0 %v628
      %v1221 = vpop.f32.mrf.mxu0
      %v1222 = vadd.f32 0.0, %v1221
      %1223 = vmatmul.f32.gmra.mxu0 %v630
      %v1224 = vpop.f32.mrf.mxu0
      %v1225 = vadd.f32 0.0, %v1224
      %1226 = vmatmul.f32.gmra.mxu0 %v632
      %v1227 = vpop.f32.mrf.mxu0
      %v1228 = vadd.f32 0.0, %v1227
      %1229 = vmatmul.f32.gmra.mxu0 %v634
      %v1230 = vpop.f32.mrf.mxu0
      %v1231 = vadd.f32 0.0, %v1230
      %1232 = vmatmul.f32.gmra.mxu0 %v636
      %v1233 = vpop.f32.mrf.mxu0
      %v1234 = vadd.f32 0.0, %v1233
      %1235 = vmatmul.f32.gmra.mxu0 %v638
      %v1236 = vpop.f32.mrf.mxu0
      %v1237 = vadd.f32 0.0, %v1236
      %1238 = vmatmul.f32.gmra.mxu0 %v640
      %v1239 = vpop.f32.mrf.mxu0
      %v1240 = vadd.f32 0.0, %v1239
      %1241 = vmatmul.f32.gmra.mxu0 %v642
      %v1242 = vpop.f32.mrf.mxu0
      %v1243 = vadd.f32 0.0, %v1242
      %1244 = vmatmul.f32.gmra.mxu0 %v644
      %v1245 = vpop.f32.mrf.mxu0
      %v1246 = vadd.f32 0.0, %v1245
      %1247 = vmatmul.f32.gmra.mxu0 %v646
      %v1248 = vpop.f32.mrf.mxu0
      %v1249 = vadd.f32 0.0, %v1248
      %1250 = vmatmul.f32.gmra.mxu0 %v648
      %v1251 = vpop.f32.mrf.mxu0
      %v1252 = vadd.f32 0.0, %v1251
      %1253 = vmatmul.f32.gmra.mxu0 %v892
      %v1254 = vpop.f32.mrf.mxu0
      %v1255 = vadd.f32 0.0, %v1254
      %1256 = vmatmul.f32.gmra.mxu0 %v895
      %v1257 = vpop.f32.mrf.mxu0
      %v1258 = vadd.f32 0.0, %v1257
      %1259 = vmatmul.f32.gmra.mxu0 %v1193
      %v1260 = vpop.f32.mrf.mxu0
      %v1261 = vadd.f32 0.0, %v1260
      %1262 = vmatmul.f32.gmra.mxu0 %v1196
      %v1263 = vpop.f32.mrf.mxu0
      %v1264 = vadd.f32 0.0, %v1263
      %1265 = vdwg.mxu0
      %v1266 = vadd.f32 %v1168, %v1219
      %v1267 = vadd.f32 %v1169, %v1222
      %v1268 = vadd.f32 %v1170, %v1225
      %v1269 = vadd.f32 %v1171, %v1228
      %v1270 = vadd.f32 %v1172, %v1231
      %v1271 = vadd.f32 %v1173, %v1234
      %v1272 = vadd.f32 %v1174, %v1237
      %v1273 = vadd.f32 %v1175, %v1240
      %v1274 = vadd.f32 %v1176, %v1243
      %v1275 = vadd.f32 %v1177, %v1246
      %v1276 = vadd.f32 %v1178, %v1249
      %v1277 = vadd.f32 %v1179, %v1252
      %v1278 = vadd.f32 %v1180, %v1255
      %v1279 = vadd.f32 %v1181, %v1258
      %v1280 = vadd.f32 %v1182, %v1261
      %v1281 = vadd.f32 %v1183, %v1264
      %v1282 = vperm.slane %v432, 7
      %v1283 = vlaneseq
      %v1284 = vshrl.u32 %v1283, 7
      %1286 = vset.pattern.permute.xlu0 %v1284
      %1287 = vperm.xlu0 %1286, %v1282
      %v1288 = vpop.permute.xlu0 %1287
      %v1289 = vmul.f32 %v1288, %v434
      %v1291 = vrot.slane %v429, 1
      %v1292 = vrot.slane %v430, 1
      %v1293 = vsel %vm475, %v1291, %v1292
      %v1294 = vrot.slane %v431, 1
      %v1295 = vsel %vm475, %v1292, %v1294
      %v1296 = vsel %vm516, %v1293, 0
      %v1298 = vsel %vm516, %v1295, 0
      %v1301 = vsel %vm549, %v1289, 0
      %1303 = vmatpush.msra.mxu0 0.0
      %1304 = vmatpush.msra.mxu0 0.0
      %1305 = vmatpush.msra.mxu0 0.0
      %1306 = vmatpush.msra.mxu0 0.0
      %1307 = vmatpush.msra.mxu0 0.0
      %1308 = vmatpush.msra.mxu0 0.0
      %1309 = vmatpush.msra.mxu0 0.0
      %1310 = vmatpush.msra.mxu0 0.0
      %1311 = vmatpush.msra.mxu0 0.0
      %1312 = vmatpush.msra.mxu0 0.0
      %1313 = vmatpush.msra.mxu0 0.0
      %1314 = vmatpush.msra.mxu0 0.0
      %1315 = vmatpush.msra.mxu0 0.0
      %1316 = vmatpush.msra.mxu0 0.0
      %1317 = vmatpush.msra.mxu0 0.0
      %1318 = vmatpush.msra.mxu0 %v1301
      %1319 = vmatmul.f32.gmra.mxu0 %v525
      %v1320 = vpop.f32.mrf.mxu0
      %v1321 = vadd.f32 0.0, %v1320
      %1322 = vmatmul.f32.gmra.mxu0 %v527
      %v1323 = vpop.f32.mrf.mxu0
      %v1324 = vadd.f32 0.0, %v1323
      %1325 = vmatmul.f32.gmra.mxu0 %v529
      %v1326 = vpop.f32.mrf.mxu0
      %v1327 = vadd.f32 0.0, %v1326
      %1328 = vmatmul.f32.gmra.mxu0 %v531
      %v1329 = vpop.f32.mrf.mxu0
      %v1330 = vadd.f32 0.0, %v1329
      %1331 = vmatmul.f32.gmra.mxu0 %v533
      %v1332 = vpop.f32.mrf.mxu0
      %v1333 = vadd.f32 0.0, %v1332
      %1334 = vmatmul.f32.gmra.mxu0 %v535
      %v1335 = vpop.f32.mrf.mxu0
      %v1336 = vadd.f32 0.0, %v1335
      %1337 = vmatmul.f32.gmra.mxu0 %v537
      %v1338 = vpop.f32.mrf.mxu0
      %v1339 = vadd.f32 0.0, %v1338
      %1340 = vmatmul.f32.gmra.mxu0 %v539
      %v1341 = vpop.f32.mrf.mxu0
      %v1342 = vadd.f32 0.0, %v1341
      %1343 = vmatmul.f32.gmra.mxu0 %v541
      %v1344 = vpop.f32.mrf.mxu0
      %v1345 = vadd.f32 0.0, %v1344
      %1346 = vmatmul.f32.gmra.mxu0 %v543
      %v1347 = vpop.f32.mrf.mxu0
      %v1348 = vadd.f32 0.0, %v1347
      %1349 = vmatmul.f32.gmra.mxu0 %v545
      %v1350 = vpop.f32.mrf.mxu0
      %v1351 = vadd.f32 0.0, %v1350
      %1352 = vmatmul.f32.gmra.mxu0 %v547
      %v1353 = vpop.f32.mrf.mxu0
      %v1354 = vadd.f32 0.0, %v1353
      %1355 = vmatmul.f32.gmra.mxu0 %v995
      %v1356 = vpop.f32.mrf.mxu0
      %v1357 = vadd.f32 0.0, %v1356
      %1358 = vmatmul.f32.gmra.mxu0 %v997
      %v1359 = vpop.f32.mrf.mxu0
      %v1360 = vadd.f32 0.0, %v1359
      %1361 = vmatmul.f32.gmra.mxu0 %v1296
      %v1362 = vpop.f32.mrf.mxu0
      %v1363 = vadd.f32 0.0, %v1362
      %1364 = vmatmul.f32.gmra.mxu0 %v1298
      %v1365 = vpop.f32.mrf.mxu0
      %v1366 = vadd.f32 0.0, %v1365
      %1367 = vdwg.mxu0
      %v1368 = vadd.f32 %v1266, %v1321
      %v1369 = vadd.f32 %v1267, %v1324
      %v1370 = vadd.f32 %v1268, %v1327
      %v1371 = vadd.f32 %v1269, %v1330
      %v1372 = vadd.f32 %v1270, %v1333
      %v1373 = vadd.f32 %v1271, %v1336
      %v1374 = vadd.f32 %v1272, %v1339
      %v1375 = vadd.f32 %v1273, %v1342
      %v1376 = vadd.f32 %v1274, %v1345
      %v1377 = vadd.f32 %v1275, %v1348
      %v1378 = vadd.f32 %v1276, %v1351
      %v1379 = vadd.f32 %v1277, %v1354
      %v1380 = vadd.f32 %v1278, %v1357
      %v1381 = vadd.f32 %v1279, %v1360
      %v1382 = vadd.f32 %v1280, %v1363
      %v1383 = vadd.f32 %v1281, %v1366
      %v1384 = vperm.slane %v433, 0
      %v1385 = vlaneseq
      %v1386 = vshrl.u32 %v1385, 7
      %1388 = vset.pattern.permute.xlu0 %v1386
      %1389 = vperm.xlu0 %1388, %v1384
      %v1390 = vpop.permute.xlu0 %1389
      %v1391 = vmul.f32 %v1390, %v434
      %v1392 = vrot.slane %v429, 2
      %v1393 = vrot.slane %v430, 2
      %v1394 = vsel %vm726, %v1392, %v1393
      %v1395 = vrot.slane %v431, 2
      %v1396 = vsel %vm726, %v1393, %v1395
      %v1397 = vsel %vm516, %v1394, 0
      %v1399 = vsel %vm516, %v1396, 0
      %v1402 = vsel %vm549, %v1391, 0
      %1404 = vmatpush.msra.mxu0 0.0
      %1405 = vmatpush.msra.mxu0 0.0
      %1406 = vmatpush.msra.mxu0 0.0
      %1407 = vmatpush.msra.mxu0 0.0
      %1408 = vmatpush.msra.mxu0 0.0
      %1409 = vmatpush.msra.mxu0 0.0
      %1410 = vmatpush.msra.mxu0 0.0
      %1411 = vmatpush.msra.mxu0 0.0
      %1412 = vmatpush.msra.mxu0 0.0
      %1413 = vmatpush.msra.mxu0 0.0
      %1414 = vmatpush.msra.mxu0 0.0
      %1415 = vmatpush.msra.mxu0 0.0
      %1416 = vmatpush.msra.mxu0 0.0
      %1417 = vmatpush.msra.mxu0 0.0
      %1418 = vmatpush.msra.mxu0 0.0
      %1419 = vmatpush.msra.mxu0 %v1402
      %1420 = vmatmul.f32.gmra.mxu0 %v775
      %v1421 = vpop.f32.mrf.mxu0
      %v1422 = vadd.f32 0.0, %v1421
      %1423 = vmatmul.f32.gmra.mxu0 %v777
      %v1424 = vpop.f32.mrf.mxu0
      %v1425 = vadd.f32 0.0, %v1424
      %1426 = vmatmul.f32.gmra.mxu0 %v779
      %v1427 = vpop.f32.mrf.mxu0
      %v1428 = vadd.f32 0.0, %v1427
      %1429 = vmatmul.f32.gmra.mxu0 %v781
      %v1430 = vpop.f32.mrf.mxu0
      %v1431 = vadd.f32 0.0, %v1430
      %1432 = vmatmul.f32.gmra.mxu0 %v783
      %v1433 = vpop.f32.mrf.mxu0
      %v1434 = vadd.f32 0.0, %v1433
      %1435 = vmatmul.f32.gmra.mxu0 %v785
      %v1436 = vpop.f32.mrf.mxu0
      %v1437 = vadd.f32 0.0, %v1436
      %1438 = vmatmul.f32.gmra.mxu0 %v787
      %v1439 = vpop.f32.mrf.mxu0
      %v1440 = vadd.f32 0.0, %v1439
      %1441 = vmatmul.f32.gmra.mxu0 %v789
      %v1442 = vpop.f32.mrf.mxu0
      %v1443 = vadd.f32 0.0, %v1442
      %1444 = vmatmul.f32.gmra.mxu0 %v791
      %v1445 = vpop.f32.mrf.mxu0
      %v1446 = vadd.f32 0.0, %v1445
      %1447 = vmatmul.f32.gmra.mxu0 %v793
      %v1448 = vpop.f32.mrf.mxu0
      %v1449 = vadd.f32 0.0, %v1448
      %1450 = vmatmul.f32.gmra.mxu0 %v795
      %v1451 = vpop.f32.mrf.mxu0
      %v1452 = vadd.f32 0.0, %v1451
      %1453 = vmatmul.f32.gmra.mxu0 %v797
      %v1454 = vpop.f32.mrf.mxu0
      %v1455 = vadd.f32 0.0, %v1454
      %1456 = vmatmul.f32.gmra.mxu0 %v1096
      %v1457 = vpop.f32.mrf.mxu0
      %v1458 = vadd.f32 0.0, %v1457
      %1459 = vmatmul.f32.gmra.mxu0 %v1098
      %v1460 = vpop.f32.mrf.mxu0
      %v1461 = vadd.f32 0.0, %v1460
      %1462 = vmatmul.f32.gmra.mxu0 %v1397
      %v1463 = vpop.f32.mrf.mxu0
      %v1464 = vadd.f32 0.0, %v1463
      %1465 = vmatmul.f32.gmra.mxu0 %v1399
      %v1466 = vpop.f32.mrf.mxu0
      %v1467 = vadd.f32 0.0, %v1466
      %1468 = vdwg.mxu0
      %v1469 = vadd.f32 %v1368, %v1422
      %v1470 = vadd.f32 %v1369, %v1425
      %v1471 = vadd.f32 %v1370, %v1428
      %v1472 = vadd.f32 %v1371, %v1431
      %v1473 = vadd.f32 %v1372, %v1434
      %v1474 = vadd.f32 %v1373, %v1437
      %v1475 = vadd.f32 %v1374, %v1440
      %v1476 = vadd.f32 %v1375, %v1443
      %v1477 = vadd.f32 %v1376, %v1446
      %v1478 = vadd.f32 %v1377, %v1449
      %v1479 = vadd.f32 %v1378, %v1452
      %v1480 = vadd.f32 %v1379, %v1455
      %v1481 = vadd.f32 %v1380, %v1458
      %v1482 = vadd.f32 %v1381, %v1461
      %v1483 = vadd.f32 %v1382, %v1464
      %v1484 = vadd.f32 %v1383, %v1467
      %v1485 = vld [vmem:[#allocation2] sm:$0xff]
      %v1486 = vld [vmem:[#allocation2 + $0x8] sm:$0xff]
      %v1487 = vld [vmem:[#allocation2 + $0x10] sm:$0xff]
      %v1488 = vld [vmem:[#allocation2 + $0x18] sm:$0xff]
      %v1489 = vld [vmem:[#allocation2 + $0x20] sm:$0xff]
      %v1490 = vld [vmem:[#allocation2 + $0x28] sm:$0xff]
      %v1491 = vld [vmem:[#allocation2 + $0x30] sm:$0xff]
      %v1492 = vld [vmem:[#allocation2 + $0x38] sm:$0xff]
      %v1493 = vld [vmem:[#allocation2 + $0x40] sm:$0xff]
      %v1494 = vld [vmem:[#allocation2 + $0x48] sm:$0xff]
      %v1495 = vld [vmem:[#allocation2 + $0x50] sm:$0xff]
      %v1496 = vld [vmem:[#allocation2 + $0x58] sm:$0xff]
      %v1497 = vld [vmem:[#allocation2 + $0x60] sm:$0xff]
      %v1498 = vld [vmem:[#allocation2 + $0x68] sm:$0xff]
      %v1499 = vld [vmem:[#allocation2 + $0x70] sm:$0xff]
      %v1500 = vld [vmem:[#allocation2 + $0x78] sm:$0xff]
      %v1501 = vadd.f32 %v1485, %v1469
      %v1502 = vadd.f32 %v1486, %v1470
      %v1503 = vadd.f32 %v1487, %v1471
      %v1504 = vadd.f32 %v1488, %v1472
      %v1505 = vadd.f32 %v1489, %v1473
      %v1506 = vadd.f32 %v1490, %v1474
      %v1507 = vadd.f32 %v1491, %v1475
      %v1508 = vadd.f32 %v1492, %v1476
      %v1509 = vadd.f32 %v1493, %v1477
      %v1510 = vadd.f32 %v1494, %v1478
      %v1511 = vadd.f32 %v1495, %v1479
      %v1512 = vadd.f32 %v1496, %v1480
      %v1513 = vadd.f32 %v1497, %v1481
      %v1514 = vadd.f32 %v1498, %v1482
      %v1515 = vadd.f32 %v1499, %v1483
      %v1516 = vadd.f32 %v1500, %v1484
      %vm1517 = vcmask 64512
      %1518 = vst.msk [vmem:[#allocation2] sm:$0xff] %vm1517, %v1501
      %1519 = vst.msk [vmem:[#allocation2 + $0x8] sm:$0xff] %vm1517, %v1502
      %1520 = vst.msk [vmem:[#allocation2 + $0x10] sm:$0xff] %vm1517, %v1503
      %1521 = vst.msk [vmem:[#allocation2 + $0x18] sm:$0xff] %vm1517, %v1504
      %1522 = vst.msk [vmem:[#allocation2 + $0x20] sm:$0xff] %vm1517, %v1505
      %1523 = vst.msk [vmem:[#allocation2 + $0x28] sm:$0xff] %vm1517, %v1506
      %1524 = vst.msk [vmem:[#allocation2 + $0x30] sm:$0xff] %vm1517, %v1507
      %1525 = vst.msk [vmem:[#allocation2 + $0x38] sm:$0xff] %vm1517, %v1508
      %1526 = vst.msk [vmem:[#allocation2 + $0x40] sm:$0xff] %vm1517, %v1509
      %1527 = vst.msk [vmem:[#allocation2 + $0x48] sm:$0xff] %vm1517, %v1510
      %1528 = vst.msk [vmem:[#allocation2 + $0x50] sm:$0xff] %vm1517, %v1511
      %1529 = vst.msk [vmem:[#allocation2 + $0x58] sm:$0xff] %vm1517, %v1512
      %1530 = vst.msk [vmem:[#allocation2 + $0x60] sm:$0xff] %vm1517, %v1513
      %1531 = vst.msk [vmem:[#allocation2 + $0x68] sm:$0xff] %vm1517, %v1514
      %1532 = vst.msk [vmem:[#allocation2 + $0x70] sm:$0xff] %vm1517, %v1515
      %1533 = vst.msk [vmem:[#allocation2 + $0x78] sm:$0xff] %vm1517, %v1516
      // Predicated region
      $region41: #{tpu_custom_call.1} parent=35 // pred_check
        %p1534 = pneg %p381
      $region42: #{tpu_custom_call.1} parent=35 // pred_check_branch
        %1536 = sbr.rel (%p1534) target = $region44
      $region43: #{tpu_custom_call.1} parent=35 // pred_region
        %v1537 = vld [vmem:[#allocation2] sm:$0xff]
        %v1538 = vld [vmem:[#allocation2 + $0x8] sm:$0xff]
        %v1539 = vld [vmem:[#allocation2 + $0x10] sm:$0xff]
        %v1540 = vld [vmem:[#allocation2 + $0x18] sm:$0xff]
        %v1541 = vld [vmem:[#allocation2 + $0x20] sm:$0xff]
        %v1542 = vld [vmem:[#allocation2 + $0x28] sm:$0xff]
        %v1543 = vld [vmem:[#allocation2 + $0x30] sm:$0xff]
        %v1544 = vld [vmem:[#allocation2 + $0x38] sm:$0xff]
        %v1545 = vld [vmem:[#allocation2 + $0x40] sm:$0xff]
        %v1546 = vld [vmem:[#allocation2 + $0x48] sm:$0xff]
        %v1547 = vld [vmem:[#allocation2 + $0x50] sm:$0xff]
        %v1548 = vld [vmem:[#allocation2 + $0x58] sm:$0xff]
        %v1549 = vld [vmem:[#allocation2 + $0x60] sm:$0xff]
        %v1550 = vld [vmem:[#allocation2 + $0x68] sm:$0xff]
        %v1551 = vld [vmem:[#allocation2 + $0x70] sm:$0xff]
        %v1552 = vld [vmem:[#allocation2 + $0x78] sm:$0xff]
        %1553 = vst.msk [vmem:[%s379] sm:$0xff] %vm1517, %v1537
        %1554 = vst.msk [vmem:[%s379 + $0x8] sm:$0xff] %vm1517, %v1538
        %1555 = vst.msk [vmem:[%s379 + $0x10] sm:$0xff] %vm1517, %v1539
        %1556 = vst.msk [vmem:[%s379 + $0x18] sm:$0xff] %vm1517, %v1540
        %1557 = vst.msk [vmem:[%s379 + $0x20] sm:$0xff] %vm1517, %v1541
        %1558 = vst.msk [vmem:[%s379 + $0x28] sm:$0xff] %vm1517, %v1542
        %1559 = vst.msk [vmem:[%s379 + $0x30] sm:$0xff] %vm1517, %v1543
        %1560 = vst.msk [vmem:[%s379 + $0x38] sm:$0xff] %vm1517, %v1544
        %1561 = vst.msk [vmem:[%s379 + $0x40] sm:$0xff] %vm1517, %v1545
        %1562 = vst.msk [vmem:[%s379 + $0x48] sm:$0xff] %vm1517, %v1546
        %1563 = vst.msk [vmem:[%s379 + $0x50] sm:$0xff] %vm1517, %v1547
        %1564 = vst.msk [vmem:[%s379 + $0x58] sm:$0xff] %vm1517, %v1548
        %1565 = vst.msk [vmem:[%s379 + $0x60] sm:$0xff] %vm1517, %v1549
        %1566 = vst.msk [vmem:[%s379 + $0x68] sm:$0xff] %vm1517, %v1550
        %1567 = vst.msk [vmem:[%s379 + $0x70] sm:$0xff] %vm1517, %v1551
        %1568 = vst.msk [vmem:[%s379 + $0x78] sm:$0xff] %vm1517, %v1552
      $region44: #{tpu_custom_call.1} parent=35 // pred_fallthru
        _
      %s1569 = smul.u32 8, %s22
      %p1570 = scmp.lt.s32.totalorder %s21, 1
      %s1571 = scalar_select %p1570, %s21, 1
      %p1572 = scmp.lt.s32.totalorder %s1569, 15
      %s1573 = scalar_select %p1572, %s1569, 15
      %p1574 = scmp.lt.s32.totalorder %s23, 0
      %s1575 = scalar_select %p1574, %s23, 0
      %s1576 = smul.addr %s1573, 2
      %s1577 = sadd.s32 %s1575, %s1576
      %s1578 = smul.addr %s1571, 32
      %s1579 = sadd.s32 %s1577, %s1578
      %s1580 = smul.addr %s1579, 8
      %s1581 = scalar_lea.vmem %s4, %s1580
      // Predicated region
      $region45: #{tpu_custom_call.1} parent=35 // pred_check
        %p1582 = pneg %p174
      $region46: #{tpu_custom_call.1} parent=35 // pred_check_branch
        %1584 = sbr.rel (%p1582) target = $region48
      $region47: #{tpu_custom_call.1} parent=35 // pred_region
        %s1585 = smul.u32 8, %s22
      $region48: #{tpu_custom_call.1} parent=35 // pred_fallthru
        _
    $region36: #{tpu_custom_call.1} parent=5 // pred_fallthru
      _
    %p1586 = scmp.le.s32.totalorder 2, %s10
    // Predicated region
    $region49: #{tpu_custom_call.1} parent=5 // pred_check
      %p1587 = pneg %p1586
    $region50: #{tpu_custom_call.1} parent=5 // pred_check_branch
      %1589 = sbr.rel (%p1587) target = $region52
    $region51: #{tpu_custom_call.1} parent=5 // pred_region
      %s1590 = ssub.s32 %s10, 2
      // Predicated region
      $region53: #{tpu_custom_call.1} parent=51 // pred_check
        %p1591 = pneg %p180
      $region54: #{tpu_custom_call.1} parent=51 // pred_check_branch
        %1593 = sbr.rel (%p1591) target = $region56
      $region55: #{tpu_custom_call.1} parent=51 // pred_region
        %s1594 = smul.u32 8, %s26
        %p1595 = scmp.lt.s32.totalorder %s25, 1
        %s1596 = scalar_select %p1595, %s25, 1
        %p1597 = scmp.lt.s32.totalorder %s1594, 15
        %s1598 = scalar_select %p1597, %s1594, 15
        %p1599 = scmp.lt.s32.totalorder %s27, 0
        %s1600 = scalar_select %p1599, %s27, 0
        %s1601 = smul.addr %s1598, 2
        %s1602 = sadd.s32 %s1600, %s1601
        %s1603 = smul.addr %s1596, 32
        %s1604 = sadd.s32 %s1602, %s1603
        %s1605 = smul.addr %s1604, 8
        %s1606 = scalar_lea.vmem %s4, %s1605
      $region56: #{tpu_custom_call.1} parent=51 // pred_fallthru
        _
    $region52: #{tpu_custom_call.1} parent=5 // pred_fallthru
      _
  $region6: #{tpu_custom_call.1} parent=0 // loop_footer
    %s14 = sadd.s32 1, %s10
  $region7: #{tpu_custom_call.1} parent=0 // loop_footer_branch
    %9 = sbr.rel target = $region3
  $region8: #{tpu_custom_call.1} parent=0 // loop_exit
    _

</llo_original>
